<compile_context>
chip_gen: v5e
topology: v5e:2x2
jax: 0.10.0
libtpu: 0.0.40
codegen_flags: <defaults>
</compile_context>

<pallas_src>
import math

import jax
import jax.numpy as jnp
from jax.experimental import pallas as pl
from jax.experimental.pallas import tpu as pltpu

LAYERS = [784, 100, 10, 100, 10, 100, 10]
NUM_LAYERS = len(LAYERS) - 1          # 6 linear layers
LANE = 128


def _round_up(n, m):
    return ((n + m - 1) // m) * m


def mlp_kernel(x_ref, w1_ref, wrest_ref, b_ref, out_ref):
    """Fused forward pass for one (bt, 784) activation tile.

    x_ref:     (bt, 784)        f32 (cast to compute dtype in-register)
    w1_ref:    (784, 128)       compute dtype (layer 1, out-dim padded)
    wrest_ref: (5, 128, 128)    compute dtype (layers 2..6, padded)
    b_ref:     (6, 128)         f32 (padded biases)
    out_ref:   (bt, 10)         f32 (written directly, no post-slice)
    """
    cd = w1_ref.dtype
    n_rest = wrest_ref.shape[0]

    # Layer 1: in-register cast, MXU matmul with f32 accumulation.
    h = jnp.dot(x_ref[...].astype(cd), w1_ref[...],
                preferred_element_type=jnp.float32)
    h = jnp.tanh((h + b_ref[0:1, :]).astype(cd))      # bias in f32, tanh in cd

    # Layers 2..6 (all padded to 128x128, weights resident in VMEM).
    for l in range(n_rest):
        h = jnp.dot(h, wrest_ref[l], preferred_element_type=jnp.float32)
        h = h + b_ref[l + 1:l + 2, :]
        if l < n_rest - 1:                            # no tanh on the last layer
            h = jnp.tanh(h.astype(cd))

    out_ref[...] = h[:, :out_ref.shape[1]]            # (bt, 10) f32


def pack_params(weights, biases, compute_dtype=jnp.bfloat16):
    """Pack + zero-pad parameters ONCE (hoisted out of the per-call path).

    weights[l]: (in_l, out_l) (already transposed vs. torch), biases[l]: (out_l,).
    Zero-padding is numerically exact: zero cols + zero bias -> 0, tanh(0)=0,
    zero rows absorb the padded activations.
    """
    w1 = jnp.zeros((LAYERS[0], LANE), jnp.float32)
    w1 = w1.at[:, :LAYERS[1]].set(weights[0]).astype(compute_dtype)

    wrest = jnp.zeros((NUM_LAYERS - 1, LANE, LANE), jnp.float32)
    for l in range(1, NUM_LAYERS):
        din, dout = weights[l].shape
        wrest = wrest.at[l - 1, :din, :dout].set(weights[l])
    wrest = wrest.astype(compute_dtype)

    b_all = jnp.zeros((NUM_LAYERS, LANE), jnp.float32)
    for l in range(NUM_LAYERS):
        b_all = b_all.at[l, :biases[l].shape[0]].set(biases[l])

    return w1, wrest, b_all


def net_xavier_forward(x, packed_params, *, batch_tile=1024):
    """x: (B, 784) f32.  packed_params: output of pack_params().  Returns (B, 10) f32."""
    w1, wrest, b_all = packed_params
    B, in_dim = x.shape
    assert in_dim == LAYERS[0]

    # Batch tile: big enough to amortize per-step overhead, small enough that
    # the "parallel" grid has >= 2 steps (both v7x TensorCores) when possible.
    bt = min(_round_up(batch_tile, 8), _round_up(B, 8))
    if B >= 16:
        bt = min(bt, _round_up(-(-B // 2), 8))
    bt = max(bt, 8)
    grid = pl.cdiv(B, bt)

    return pl.pallas_call(
        mlp_kernel,
        out_shape=jax.ShapeDtypeStruct((B, LAYERS[-1]), jnp.float32),
        grid_spec=pltpu.PrefetchScalarGridSpec(
            num_scalar_prefetch=0,
            grid=(grid,),
            in_specs=[
                pl.BlockSpec((bt, in_dim), lambda i: (i, 0)),      # x tile
                pl.BlockSpec(w1.shape, lambda i: (0, 0)),          # W1 (resident)
                pl.BlockSpec(wrest.shape, lambda i: (0, 0, 0)),    # W2..W6
                pl.BlockSpec(b_all.shape, lambda i: (0, 0)),       # biases
            ],
            out_specs=pl.BlockSpec((bt, LAYERS[-1]), lambda i: (i, 0)),
        ),
        compiler_params=pltpu.CompilerParams(
            dimension_semantics=("parallel",)),       # batch tiles shard across TCs
    )(x, w1, wrest, b_all)


def init_params(key):
    """Xavier-uniform weights + PyTorch-default uniform biases."""
    weights, biases = [], []
    for fan_in, fan_out in zip(LAYERS[:-1], LAYERS[1:]):
        key, kw, kb = jax.random.split(key, 3)
        a = math.sqrt(6.0 / (fan_in + fan_out))          # xavier_uniform_
        w_t = jax.random.uniform(kw, (fan_in, fan_out), jnp.float32, -a, a)
        bound = 1.0 / math.sqrt(fan_in)                  # nn.Linear bias default
        b = jax.random.uniform(kb, (fan_out,), jnp.float32, -bound, bound)
        weights.append(w_t)
        biases.append(b)
    return weights, biases


def reference_forward(x, weights, biases, compute_dtype=jnp.float32):
    """Pure-JAX reference mirroring the kernel's dtype path."""
    h = x
    for l, (w, b) in enumerate(zip(weights, biases)):
        h = jnp.dot(h.astype(compute_dtype), w.astype(compute_dtype),
                    preferred_element_type=jnp.float32) + b
        if l < NUM_LAYERS - 1:
            h = jnp.tanh(h.astype(compute_dtype)).astype(jnp.float32)
    return h


if __name__ == "__main__":
    key = jax.random.PRNGKey(0)
    key, kx = jax.random.split(key)

    # Deliberately NOT a multiple of the batch tile -> exercises the ragged
    # (cdiv) grid of 2 steps with a clipped last block.
    B = 200
    x = jax.random.normal(kx, (B, LAYERS[0]), jnp.float32)
    weights, biases = init_params(key)

    # bf16-matmul path (default / fast path on all generations).
    params_bf16 = pack_params(weights, biases, jnp.bfloat16)
    out = net_xavier_forward(x, params_bf16, batch_tile=128)
    out = jax.block_until_ready(out)
    assert out.shape == (B, LAYERS[-1]), out.shape

    ref_bf16 = reference_forward(x, weights, biases, jnp.bfloat16)
    err = float(jnp.max(jnp.abs(out - ref_bf16)))
    assert err < 2e-2, err

    ref_f32 = reference_forward(x, weights, biases, jnp.float32)
    err32 = float(jnp.max(jnp.abs(out - ref_f32)))
    assert err32 < 1e-1, err32

    # Exact-f32 opt-in mode against the f32 reference.
    params_f32 = pack_params(weights, biases, jnp.float32)
    out_f32 = net_xavier_forward(x, params_f32, batch_tile=128)
    out_f32 = jax.block_until_ready(out_f32)
    err_exact = float(jnp.max(jnp.abs(out_f32 - ref_f32)))
    assert err_exact < 1e-3, err_exact

    # TODO(synk): MNIST data loading / training loop from the original script is
    # out of scope; only the Net_Xavier forward pass is implemented as a kernel.
    print("KERNEL_OK")
</pallas_src>

<mosaic_0001>
module attributes {stable_mosaic.version = 11 : i64} {
  func.func @mlp_kernel(%arg0: i32, %arg1: memref<104x784xf32, #tpu.memory_space<vmem>>, %arg2: memref<784x128xbf16, #tpu.memory_space<vmem>>, %arg3: memref<5x128x128xbf16, #tpu.memory_space<vmem>>, %arg4: memref<6x128xf32, #tpu.memory_space<vmem>>, %arg5: memref<104x10xf32, #tpu.memory_space<vmem>>) attributes {dimension_semantics = [#tpu.dimension_semantics<parallel>], iteration_bounds = array<i64: 2>, scalar_prefetch = 0 : i64, scratch_operands = 0 : i64, tpu.core_type = #tpu.core_type<tc>, window_params = [{transform_indices = @transform_0, window_bounds = array<i64: 104, 784>}, {pipeline_mode = #tpu.pipeline_mode<synchronous>, transform_indices = @transform_1, window_bounds = array<i64: 784, 128>}, {pipeline_mode = #tpu.pipeline_mode<synchronous>, transform_indices = @transform_2, window_bounds = array<i64: 5, 128, 128>}, {pipeline_mode = #tpu.pipeline_mode<synchronous>, transform_indices = @transform_3, window_bounds = array<i64: 6, 128>}, {transform_indices = @transform_4, window_bounds = array<i64: 104, 10>}]} {
    %c0 = arith.constant 0 : index
    %c0_0 = arith.constant 0 : index
    %0 = vector.load %arg1[%c0, %c0_0] : memref<104x784xf32, #tpu.memory_space<vmem>>, vector<104x784xf32>
    %1 = arith.truncf %0 : vector<104x784xf32> to vector<104x784xbf16>
    %c0_1 = arith.constant 0 : index
    %c0_2 = arith.constant 0 : index
    %2 = vector.load %arg2[%c0_1, %c0_2] : memref<784x128xbf16, #tpu.memory_space<vmem>>, vector<784x128xbf16>
    %cst = arith.constant dense<0.000000e+00> : vector<104x128xf32>
    %3 = tpu.matmul %1, %2, %cst {dimension_numbers = #tpu.dot_dimension_numbers<[1], [0], [0], [1], [0, 0, 1, 1], [], []>} : vector<104x784xbf16>, vector<784x128xbf16>, vector<104x128xf32> -> vector<104x128xf32>
    %c0_3 = arith.constant 0 : index
    %c0_4 = arith.constant 0 : index
    %4 = vector.load %arg4[%c0_3, %c0_4] : memref<6x128xf32, #tpu.memory_space<vmem>>, vector<1x128xf32>
    %5 = vector.broadcast %4 : vector<1x128xf32> to vector<104x128xf32>
    %6 = arith.addf %3, %5 : vector<104x128xf32>
    %7 = arith.truncf %6 : vector<104x128xf32> to vector<104x128xbf16>
    %8 = math.tanh %7 : vector<104x128xbf16>
    %c0_5 = arith.constant 0 : index
    %c0_6 = arith.constant 0 : index
    %c0_7 = arith.constant 0 : index
    %9 = vector.load %arg3[%c0_5, %c0_6, %c0_7] : memref<5x128x128xbf16, #tpu.memory_space<vmem>>, vector<1x128x128xbf16>
    %10 = vector.shape_cast %9 : vector<1x128x128xbf16> to vector<128x128xbf16>
    %cst_8 = arith.constant dense<0.000000e+00> : vector<104x128xf32>
    %11 = tpu.matmul %8, %10, %cst_8 {dimension_numbers = #tpu.dot_dimension_numbers<[1], [0], [0], [1], [0, 0, 1, 1], [], []>} : vector<104x128xbf16>, vector<128x128xbf16>, vector<104x128xf32> -> vector<104x128xf32>
    %c1 = arith.constant 1 : index
    %c0_9 = arith.constant 0 : index
    %12 = vector.load %arg4[%c1, %c0_9] : memref<6x128xf32, #tpu.memory_space<vmem>>, vector<1x128xf32>
    %13 = vector.broadcast %12 : vector<1x128xf32> to vector<104x128xf32>
    %14 = arith.addf %11, %13 : vector<104x128xf32>
    %15 = arith.truncf %14 : vector<104x128xf32> to vector<104x128xbf16>
    %16 = math.tanh %15 : vector<104x128xbf16>
    %c1_10 = arith.constant 1 : index
    %c0_11 = arith.constant 0 : index
    %c0_12 = arith.constant 0 : index
    %17 = vector.load %arg3[%c1_10, %c0_11, %c0_12] : memref<5x128x128xbf16, #tpu.memory_space<vmem>>, vector<1x128x128xbf16>
    %18 = vector.shape_cast %17 : vector<1x128x128xbf16> to vector<128x128xbf16>
    %cst_13 = arith.constant dense<0.000000e+00> : vector<104x128xf32>
    %19 = tpu.matmul %16, %18, %cst_13 {dimension_numbers = #tpu.dot_dimension_numbers<[1], [0], [0], [1], [0, 0, 1, 1], [], []>} : vector<104x128xbf16>, vector<128x128xbf16>, vector<104x128xf32> -> vector<104x128xf32>
    %c2 = arith.constant 2 : index
    %c0_14 = arith.constant 0 : index
    %20 = vector.load %arg4[%c2, %c0_14] : memref<6x128xf32, #tpu.memory_space<vmem>>, vector<1x128xf32>
    %21 = vector.broadcast %20 : vector<1x128xf32> to vector<104x128xf32>
    %22 = arith.addf %19, %21 : vector<104x128xf32>
    %23 = arith.truncf %22 : vector<104x128xf32> to vector<104x128xbf16>
    %24 = math.tanh %23 : vector<104x128xbf16>
    %c2_15 = arith.constant 2 : index
    %c0_16 = arith.constant 0 : index
    %c0_17 = arith.constant 0 : index
    %25 = vector.load %arg3[%c2_15, %c0_16, %c0_17] : memref<5x128x128xbf16, #tpu.memory_space<vmem>>, vector<1x128x128xbf16>
    %26 = vector.shape_cast %25 : vector<1x128x128xbf16> to vector<128x128xbf16>
    %cst_18 = arith.constant dense<0.000000e+00> : vector<104x128xf32>
    %27 = tpu.matmul %24, %26, %cst_18 {dimension_numbers = #tpu.dot_dimension_numbers<[1], [0], [0], [1], [0, 0, 1, 1], [], []>} : vector<104x128xbf16>, vector<128x128xbf16>, vector<104x128xf32> -> vector<104x128xf32>
    %c3 = arith.constant 3 : index
    %c0_19 = arith.constant 0 : index
    %28 = vector.load %arg4[%c3, %c0_19] : memref<6x128xf32, #tpu.memory_space<vmem>>, vector<1x128xf32>
    %29 = vector.broadcast %28 : vector<1x128xf32> to vector<104x128xf32>
    %30 = arith.addf %27, %29 : vector<104x128xf32>
    %31 = arith.truncf %30 : vector<104x128xf32> to vector<104x128xbf16>
    %32 = math.tanh %31 : vector<104x128xbf16>
    %c3_20 = arith.constant 3 : index
    %c0_21 = arith.constant 0 : index
    %c0_22 = arith.constant 0 : index
    %33 = vector.load %arg3[%c3_20, %c0_21, %c0_22] : memref<5x128x128xbf16, #tpu.memory_space<vmem>>, vector<1x128x128xbf16>
    %34 = vector.shape_cast %33 : vector<1x128x128xbf16> to vector<128x128xbf16>
    %cst_23 = arith.constant dense<0.000000e+00> : vector<104x128xf32>
    %35 = tpu.matmul %32, %34, %cst_23 {dimension_numbers = #tpu.dot_dimension_numbers<[1], [0], [0], [1], [0, 0, 1, 1], [], []>} : vector<104x128xbf16>, vector<128x128xbf16>, vector<104x128xf32> -> vector<104x128xf32>
    %c4 = arith.constant 4 : index
    %c0_24 = arith.constant 0 : index
    %36 = vector.load %arg4[%c4, %c0_24] : memref<6x128xf32, #tpu.memory_space<vmem>>, vector<1x128xf32>
    %37 = vector.broadcast %36 : vector<1x128xf32> to vector<104x128xf32>
    %38 = arith.addf %35, %37 : vector<104x128xf32>
    %39 = arith.truncf %38 : vector<104x128xf32> to vector<104x128xbf16>
    %40 = math.tanh %39 : vector<104x128xbf16>
    %c4_25 = arith.constant 4 : index
    %c0_26 = arith.constant 0 : index
    %c0_27 = arith.constant 0 : index
    %41 = vector.load %arg3[%c4_25, %c0_26, %c0_27] : memref<5x128x128xbf16, #tpu.memory_space<vmem>>, vector<1x128x128xbf16>
    %42 = vector.shape_cast %41 : vector<1x128x128xbf16> to vector<128x128xbf16>
    %cst_28 = arith.constant dense<0.000000e+00> : vector<104x128xf32>
    %43 = tpu.matmul %40, %42, %cst_28 {dimension_numbers = #tpu.dot_dimension_numbers<[1], [0], [0], [1], [0, 0, 1, 1], [], []>} : vector<104x128xbf16>, vector<128x128xbf16>, vector<104x128xf32> -> vector<104x128xf32>
    %c5 = arith.constant 5 : index
    %c0_29 = arith.constant 0 : index
    %44 = vector.load %arg4[%c5, %c0_29] : memref<6x128xf32, #tpu.memory_space<vmem>>, vector<1x128xf32>
    %45 = vector.broadcast %44 : vector<1x128xf32> to vector<104x128xf32>
    %46 = arith.addf %43, %45 : vector<104x128xf32>
    %47 = vector.extract_strided_slice %46 {offsets = [0, 0], sizes = [104, 10], strides = [1, 1]} : vector<104x128xf32> to vector<104x10xf32>
    %c0_30 = arith.constant 0 : index
    %c0_31 = arith.constant 0 : index
    %48 = vector.load %arg5[%c0_30, %c0_31] : memref<104x10xf32, #tpu.memory_space<vmem>>, vector<104x10xf32>
    tpu.vector_store %arg5[%c0_30, %c0_31], %47 {strides = array<i32>} : memref<104x10xf32, #tpu.memory_space<vmem>>, vector<104x10xf32>,
    return
  }
  func.func @transform_0(%arg0: i32) -> (i32, i32) {
    %c0_i32 = arith.constant 0 : i32
    %c0_i32_0 = arith.constant 0 : i32
    return %arg0, %c0_i32 : i32, i32
  }
  func.func @transform_1(%arg0: i32) -> (i32, i32) {
    %c0_i32 = arith.constant 0 : i32
    %c0_i32_0 = arith.constant 0 : i32
    %c0_i32_1 = arith.constant 0 : i32
    return %c0_i32, %c0_i32_0 : i32, i32
  }
  func.func @transform_2(%arg0: i32) -> (i32, i32, i32) {
    %c0_i32 = arith.constant 0 : i32
    %c0_i32_0 = arith.constant 0 : i32
    %c0_i32_1 = arith.constant 0 : i32
    %c0_i32_2 = arith.constant 0 : i32
    return %c0_i32, %c0_i32_0, %c0_i32_1 : i32, i32, i32
  }
  func.func @transform_3(%arg0: i32) -> (i32, i32) {
    %c0_i32 = arith.constant 0 : i32
    %c0_i32_0 = arith.constant 0 : i32
    %c0_i32_1 = arith.constant 0 : i32
    return %c0_i32, %c0_i32_0 : i32, i32
  }
  func.func @transform_4(%arg0: i32) -> (i32, i32) {
    %c0_i32 = arith.constant 0 : i32
    %c0_i32_0 = arith.constant 0 : i32
    return %arg0, %c0_i32 : i32, i32
  }
}

</mosaic_0001>

<llo_original>
// kernel: tpu_custom_call.1
$region0: #{tpu_custom_call.1}
  #allocation0 [shape = 'u32[]', space=smem, size = 0x4, offset = 0x4, fixed_abs, tag = 'smem constant byte address 0x4 - core index']
  #allocation1 [shape = 'u32[72,128]{1,0:T(1,128)}', space=vmem, size = 0x9000, scoped, tag = 'internal scratch']
  %s0 = inlined_call_operand.hbm [shape: f32[200,784], index: 0, kind: input, shape index: {}]
  %s1 = inlined_call_operand.hbm [shape: bf16[784,128], index: 1, kind: input, shape index: {}]
  %s2 = inlined_call_operand.hbm [shape: bf16[5,128,128], index: 2, kind: input, shape index: {}]
  %s3 = inlined_call_operand.hbm [shape: f32[6,128], index: 3, kind: input, shape index: {}]
  %s4 = inlined_call_operand.vmem [shape: f32[200,10], index: 4, kind: output, shape index: {}]
  %s5 = sld [smem:[#allocation0]]
  $region113: #{tpu_custom_call.1} parent=0
    _
  %s7 = ssub.s32 1, %s5
  %s8 = scalar_select 0, %s7, %s5
  $region1: #{tpu_custom_call.1} parent=0
    #allocation2 [shape = 'u8[745472]{0}', space=vmem, size = 0xb6000, scoped, tag = 'input window, operand 0']
    #allocation3 [shape = 's32[2]{0}', space=sflag, size = 0x8, scoped, tag = 'scoped memory for tpu_custom_call.1']
    #allocation4 [shape = 'u8[200704]{0}', space=vmem, size = 0x31000, scoped, tag = 'input window, operand 1, single buffered']
    #allocation5 [shape = 's32[1]{0}', space=sflag, size = 0x4, scoped, tag = 'scoped memory for tpu_custom_call.1']
    #allocation6 [shape = 'u8[163840]{0}', space=vmem, size = 0x28000, scoped, tag = 'input window, operand 2, single buffered']
    #allocation7 [shape = 'u8[4096]{0}', space=vmem, size = 0x1000, scoped, tag = 'input window, operand 3, single buffered']
    #allocation8 [shape = 's32[1]{0}', space=sflag, size = 0x4, scoped, tag = 'scoped memory for tpu_custom_call.1']
    #allocation9 [shape = 'u8[106496]{0}', space=vmem, size = 0x1a000, scoped, tag = 'output window, operand 0']
    %9 = vsyncpa [#allocation3], 0
    %s10 = scalar_lea.sflag [#allocation3], 1
    %11 = vsyncpa %s10, 0
    %12 = vsyncpa [#allocation5], 0
    %13 = vsyncpa [#allocation8], 0
    loop: start=0, step=1, limit=4
    $region2: #{tpu_custom_call.1} parent=1 // loop_pre_header
      _
    $region3: #{tpu_custom_call.1} parent=1 // loop_header
      %s15 = sphi 0, %s19
      %p16 = scmp.ge.s32.totalorder %s15, 4
      %s25 = sphi 0, %s27
      %s28 = sphi 0, %s25
      %s29 = sphi 0, %s28
      %s45 = sphi 0, %s29
      %s49 = sphi 0, %s49
      %s51 = sphi 0, %s49
      %s52 = sphi 0, %s51
      %s66 = sphi 0, %s52
      %s70 = sphi 0, %s70
      %s72 = sphi 0, %s70
      %s73 = sphi 0, %s72
      %s87 = sphi 0, %s73
      %s91 = sphi 0, %s91
      %s93 = sphi 0, %s91
      %s94 = sphi 0, %s93
      %s108 = sphi 0, %s94
      %s114 = sphi 0, %s116
      %s117 = sphi 0, %s114
      %s118 = sphi 0, %s117
      %s134 = sphi 0, %s118
    $region4: #{tpu_custom_call.1} parent=1 // loop_header_branch
      %18 = sbr.rel (%p16) target = $region8
    $region5: #{tpu_custom_call.1} parent=1 // loop_body
      %s20 = ssub.s32 %s15, 1
      %s21 = ssub.s32 %s15, 2
      %s22 = sadd.s32 %s15, 1
      %s23 = ssub.s32 %s15, %s22
      %p24 = scmp.eq.s32.totalorder %s23, 0
      %s26 = sadd.s32 %s25, 1
      %s27 = scalar_select %p24, %s25, %s26
      %p30 = pneg %p24
      %p31 = scmp.eq.s32.totalorder %s15, 1
      %p32 = por %p30, %p31
      %p33 = scmp.ne.s32.totalorder %s25, %s28
      %p34 = scmp.eq.s32.totalorder %s15, 0
      %p35 = por %p33, %p34
      %p36 = scmp.ne.s32.totalorder %s25, %s28
      %p37 = scmp.eq.s32.totalorder %s20, 1
      %p38 = por %p36, %p37
      %p39 = scmp.ne.s32.totalorder %s28, %s29
      %p40 = scmp.eq.s32.totalorder %s20, 0
      %p41 = por %p39, %p40
      %p42 = scmp.ne.s32.totalorder %s28, %s29
      %p43 = scmp.eq.s32.totalorder %s21, 1
      %p44 = por %p42, %p43
      %p46 = scmp.ne.s32.totalorder %s29, %s45
      %p47 = scmp.eq.s32.totalorder %s21, 0
      %p48 = por %p46, %p47
      %s50 = sadd.s32 %s49, 1
      %p53 = scmp.eq.s32.totalorder %s15, 1
      %p54 = scmp.ne.s32.totalorder %s49, %s51
      %p55 = scmp.eq.s32.totalorder %s15, 0
      %p56 = por %p54, %p55
      %p57 = scmp.ne.s32.totalorder %s49, %s51
      %p58 = scmp.eq.s32.totalorder %s20, 1
      %p59 = por %p57, %p58
      %p60 = scmp.ne.s32.totalorder %s51, %s52
      %p61 = scmp.eq.s32.totalorder %s20, 0
      %p62 = por %p60, %p61
      %p63 = scmp.ne.s32.totalorder %s51, %s52
      %p64 = scmp.eq.s32.totalorder %s21, 1
      %p65 = por %p63, %p64
      %p67 = scmp.ne.s32.totalorder %s52, %s66
      %p68 = scmp.eq.s32.totalorder %s21, 0
      %p69 = por %p67, %p68
      %s71 = sadd.s32 %s70, 1
      %p74 = scmp.eq.s32.totalorder %s15, 1
      %p75 = scmp.ne.s32.totalorder %s70, %s72
      %p76 = scmp.eq.s32.totalorder %s15, 0
      %p77 = por %p75, %p76
      %p78 = scmp.ne.s32.totalorder %s70, %s72
      %p79 = scmp.eq.s32.totalorder %s20, 1
      %p80 = por %p78, %p79
      %p81 = scmp.ne.s32.totalorder %s72, %s73
      %p82 = scmp.eq.s32.totalorder %s20, 0
      %p83 = por %p81, %p82
      %p84 = scmp.ne.s32.totalorder %s72, %s73
      %p85 = scmp.eq.s32.totalorder %s21, 1
      %p86 = por %p84, %p85
      %p88 = scmp.ne.s32.totalorder %s73, %s87
      %p89 = scmp.eq.s32.totalorder %s21, 0
      %p90 = por %p88, %p89
      %s92 = sadd.s32 %s91, 1
      %p95 = scmp.eq.s32.totalorder %s15, 1
      %p96 = scmp.ne.s32.totalorder %s91, %s93
      %p97 = scmp.eq.s32.totalorder %s15, 0
      %p98 = por %p96, %p97
      %p99 = scmp.ne.s32.totalorder %s91, %s93
      %p100 = scmp.eq.s32.totalorder %s20, 1
      %p101 = por %p99, %p100
      %p102 = scmp.ne.s32.totalorder %s93, %s94
      %p103 = scmp.eq.s32.totalorder %s20, 0
      %p104 = por %p102, %p103
      %p105 = scmp.ne.s32.totalorder %s93, %s94
      %p106 = scmp.eq.s32.totalorder %s21, 1
      %p107 = por %p105, %p106
      %p109 = scmp.ne.s32.totalorder %s94, %s108
      %p110 = scmp.eq.s32.totalorder %s21, 0
      %p111 = por %p109, %p110
      %s112 = ssub.s32 %s15, %s22
      %p113 = scmp.eq.s32.totalorder %s112, 0
      %s115 = sadd.s32 %s114, 1
      %s116 = scalar_select %p113, %s114, %s115
      %p119 = pneg %p113
      %p120 = scmp.eq.s32.totalorder %s15, 1
      %p121 = por %p119, %p120
      %p122 = scmp.ne.s32.totalorder %s114, %s117
      %p123 = scmp.eq.s32.totalorder %s15, 0
      %p124 = por %p122, %p123
      %p125 = scmp.ne.s32.totalorder %s114, %s117
      %p126 = scmp.eq.s32.totalorder %s20, 1
      %p127 = por %p125, %p126
      %p128 = scmp.ne.s32.totalorder %s117, %s118
      %p129 = scmp.eq.s32.totalorder %s20, 0
      %p130 = por %p128, %p129
      %p131 = scmp.ne.s32.totalorder %s117, %s118
      %p132 = scmp.eq.s32.totalorder %s21, 1
      %p133 = por %p131, %p132
      %p135 = scmp.ne.s32.totalorder %s118, %s134
      %p136 = scmp.eq.s32.totalorder %s21, 0
      %p137 = por %p135, %p136
      %p138 = scmp.le.s32.totalorder 1, %s15
      %p139 = scmp.lt.s32.totalorder %s15, 3
      %p140 = pnand %p138, %p139
      %p141 = pneg %p140
      // Predicated region
      $region9: #{tpu_custom_call.1} parent=5 // pred_check
        _
      $region10: #{tpu_custom_call.1} parent=5 // pred_check_branch
        %143 = sbr.rel (%p140) target = $region12
      $region11: #{tpu_custom_call.1} parent=5 // pred_region
        %s144 = ssub.s32 %s15, 1
        // Predicated region
        $region13: #{tpu_custom_call.1} parent=11 // pred_check
          %p145 = pneg %p62
        $region14: #{tpu_custom_call.1} parent=11 // pred_check_branch
          %147 = sbr.rel (%p145) target = $region16
        $region15: #{tpu_custom_call.1} parent=11 // pred_region
          %149 = vsyncadd [#allocation5], 0
          %s150 = sshll.u32 %s1, 4
          %s151 = int_to_ptr.hbm [resolvable:$true] %s150
          %s152 = sshll.u32 [#allocation4], 4
          %s153 = int_to_ptr.vmem [resolvable:$true] %s152
          %158 = dma.hbm_to_vmem [thread:$0]  %s151, 6272, %s153, [#allocation5], 64, 64, 4
        $region16: #{tpu_custom_call.1} parent=11 // pred_fallthru
          _
        // Predicated region
        $region17: #{tpu_custom_call.1} parent=11 // pred_check
          %p159 = pneg %p83
        $region18: #{tpu_custom_call.1} parent=11 // pred_check_branch
          %161 = sbr.rel (%p159) target = $region20
        $region19: #{tpu_custom_call.1} parent=11 // pred_region
          %163 = vsyncadd [#allocation5], 0
          %s164 = sshll.u32 %s2, 4
          %s165 = int_to_ptr.hbm [resolvable:$true] %s164
          %s166 = sshll.u32 [#allocation6], 4
          %s167 = int_to_ptr.vmem [resolvable:$true] %s166
          %172 = dma.hbm_to_vmem [thread:$0]  %s165, 5120, %s167, [#allocation5], 64, 64, 4
        $region20: #{tpu_custom_call.1} parent=11 // pred_fallthru
          _
        // Predicated region
        $region21: #{tpu_custom_call.1} parent=11 // pred_check
          %p173 = pneg %p104
        $region22: #{tpu_custom_call.1} parent=11 // pred_check_branch
          %175 = sbr.rel (%p173) target = $region24
        $region23: #{tpu_custom_call.1} parent=11 // pred_region
          %177 = vsyncadd [#allocation8], 0
          %s179 = sshll.u32 %s3, 4
          %s180 = int_to_ptr.hbm [resolvable:$true] %s179
          %s181 = sshll.u32 [#allocation7], 4
          %s182 = int_to_ptr.vmem [resolvable:$true] %s181
          %184 = dma.hbm_to_vmem [thread:$0]  %s180, 128, %s182, [#allocation8]
        $region24: #{tpu_custom_call.1} parent=11 // pred_fallthru
          _
      $region12: #{tpu_custom_call.1} parent=5 // pred_fallthru
        _
      %p185 = scmp.lt.s32.totalorder %s15, 2
      // Predicated region
      $region25: #{tpu_custom_call.1} parent=5 // pred_check
        %p186 = pneg %p185
      $region26: #{tpu_custom_call.1} parent=5 // pred_check_branch
        %188 = sbr.rel (%p186) target = $region28
      $region27: #{tpu_custom_call.1} parent=5 // pred_region
        // Predicated region
        $region29: #{tpu_custom_call.1} parent=27 // pred_check
          %p189 = pneg %p35
        $region30: #{tpu_custom_call.1} parent=27 // pred_check_branch
          %191 = sbr.rel (%p189) target = $region32
        $region31: #{tpu_custom_call.1} parent=27 // pred_region
          %s192 = sand.u32 %s25, 1
          %s193 = scalar_lea.sflag [#allocation3], %s192
          %s194 = sand.u32 %s25, 1
          %s195 = smul.addr %s194, 728
          %s196 = scalar_lea.vmem [#allocation2], %s195
          %s197 = smul.u32 13, %s15
          %s198 = ssub.s32 25, %s197
          %p199 = scmp.lt.s32.totalorder %s198, 13
          %s200 = scalar_select %p199, %s198, 13
          %s201 = smul.u32 8, %s200
          %s202 = smul.u32 %s201, 7
          %s203 = ssub.s32 728, %s202
          %s204 = sshll.u32 %s203, 4
          %205 = vsyncadd %s193, %s204
          %p206 = scmp.ne.s32.totalorder 0, %s202
          %s207 = smul.addr %s197, 7
          %s208 = smul.addr %s207, 8
          %s209 = scalar_lea.hbm %s0, %s208
          %s210 = smul.u32 56, %s200
          %s211 = sshll.u32 %s209, 4
          %s212 = int_to_ptr.hbm [resolvable:$true] %s211
          %s213 = sshll.u32 %s196, 4
          %s214 = int_to_ptr.vmem [resolvable:$true] %s213
          %s215 = sshll.u32 %s210, 4
          %219 = dma.hbm_to_vmem [thread:$0]  (%p206), %s212, %s215, %s214, %s193, 896, 896, 56
        $region32: #{tpu_custom_call.1} parent=27 // pred_fallthru
          _
      $region28: #{tpu_custom_call.1} parent=5 // pred_fallthru
        _
      %p220 = scmp.le.s32.totalorder 1, %s15
      %p221 = scmp.lt.s32.totalorder %s15, 3
      %p222 = pnand %p220, %p221
      %p223 = pneg %p222
      // Predicated region
      $region33: #{tpu_custom_call.1} parent=5 // pred_check
        _
      $region34: #{tpu_custom_call.1} parent=5 // pred_check_branch
        %225 = sbr.rel (%p222) target = $region36
      $region35: #{tpu_custom_call.1} parent=5 // pred_region
        %s226 = ssub.s32 %s15, 1
        %s227 = sand.u32 %s28, 1
        %s228 = scalar_lea.sflag [#allocation3], %s227
        %s229 = sand.u32 %s28, 1
        %s230 = smul.addr %s229, 728
        %s231 = scalar_lea.vmem [#allocation2], %s230
        // Predicated region
        $region37: #{tpu_custom_call.1} parent=35 // pred_check
          %p232 = pneg %p41
        $region38: #{tpu_custom_call.1} parent=35 // pred_check_branch
          %234 = sbr.rel (%p232) target = $region40
        $region39: #{tpu_custom_call.1} parent=35 // pred_region
          %236 = dma.done %s228, 11648
        $region40: #{tpu_custom_call.1} parent=35 // pred_fallthru
          _
        // Predicated region
        $region41: #{tpu_custom_call.1} parent=35 // pred_check
          %p237 = pneg %p62
        $region42: #{tpu_custom_call.1} parent=35 // pred_check_branch
          %239 = sbr.rel (%p237) target = $region44
        $region43: #{tpu_custom_call.1} parent=35 // pred_region
          %241 = dma.done [#allocation5], 6272
        $region44: #{tpu_custom_call.1} parent=35 // pred_fallthru
          _
        // Predicated region
        $region45: #{tpu_custom_call.1} parent=35 // pred_check
          %p242 = pneg %p83
        $region46: #{tpu_custom_call.1} parent=35 // pred_check_branch
          %244 = sbr.rel (%p242) target = $region48
        $region47: #{tpu_custom_call.1} parent=35 // pred_region
          %246 = dma.done [#allocation5], 5120
        $region48: #{tpu_custom_call.1} parent=35 // pred_fallthru
          _
        // Predicated region
        $region49: #{tpu_custom_call.1} parent=35 // pred_check
          %p247 = pneg %p104
        $region50: #{tpu_custom_call.1} parent=35 // pred_check_branch
          %249 = sbr.rel (%p247) target = $region52
        $region51: #{tpu_custom_call.1} parent=35 // pred_region
          %251 = dma.done [#allocation8], 128
        $region52: #{tpu_custom_call.1} parent=35 // pred_fallthru
          _
        %s252 = sand.u32 %s28, 1
        %s253 = scalar_lea.sflag [#allocation3], %s252
        %s254 = sand.u32 %s28, 1
        %s255 = smul.addr %s254, 728
        %s256 = scalar_lea.vmem [#allocation2], %s255
        %p257 = pneg %p41
        %p258 = pneg %p38
        %p259 = pneg %p62
        %p260 = pneg %p59
        %p261 = pneg %p83
        %p262 = pneg %p80
        %p263 = pneg %p104
        %p264 = pneg %p101
        %p265 = pneg %p130
        %p266 = pneg %p127
        %s267 = sand.u32 %s117, 1
        %s268 = sand.u32 %s117, 1
        %s269 = smul.addr %s268, 104
        %s270 = scalar_lea.vmem [#allocation9], %s269
        %s271 = smul.u32 13, %s20
        %s272 = ssub.s32 25, %s271
        %p273 = scmp.lt.s32.totalorder %s272, 13
        %s274 = scalar_select %p273, %s272, 13
        %s275 = smul.u32 8, %s274
        %s276 = smul.u32 %s275, 7
        %s277 = smul.u32 13, %s20
        %s278 = ssub.s32 25, %s277
        %p279 = scmp.lt.s32.totalorder %s278, 13
        %s280 = scalar_select %p279, %s278, 13
        %s281 = smul.u32 8, %s280
        %v283 = vld [vmem:[%s231] sm:$0xff]
        %v284 = vld [vmem:[%s231 + $0x8] sm:$0xff]
        %v285 = vld [vmem:[%s231 + $0x10] sm:$0xff]
        %v286 = vld [vmem:[%s231 + $0x18] sm:$0xff]
        %v287 = vld [vmem:[%s231 + $0x20] sm:$0xff]
        %v288 = vld [vmem:[%s231 + $0x28] sm:$0xff]
        %v289 = vld [vmem:[%s231 + $0x30] sm:$0xff]
        %v290 = vld [vmem:[%s231 + $0x38] sm:$0xff]
        %v291 = vld [vmem:[%s231 + $0x40] sm:$0xff]
        %v292 = vld [vmem:[%s231 + $0x48] sm:$0xff]
        %v293 = vld [vmem:[%s231 + $0x50] sm:$0xff]
        %v294 = vld [vmem:[%s231 + $0x58] sm:$0xff]
        %v295 = vld [vmem:[%s231 + $0x60] sm:$0xff]
        %v296 = vld [vmem:[%s231 + $0x68] sm:$0xff]
        %v297 = vld [vmem:[%s231 + $0x70] sm:$0xff]
        %v298 = vld [vmem:[%s231 + $0x78] sm:$0xff]
        %v299 = vld [vmem:[%s231 + $0x80] sm:$0xff]
        %v300 = vld [vmem:[%s231 + $0x88] sm:$0xff]
        %v301 = vld [vmem:[%s231 + $0x90] sm:$0xff]
        %v302 = vld [vmem:[%s231 + $0x98] sm:$0xff]
        %v303 = vld [vmem:[%s231 + $0xa0] sm:$0xff]
        %v304 = vld [vmem:[%s231 + $0xa8] sm:$0xff]
        %v305 = vld [vmem:[%s231 + $0xb0] sm:$0xff]
        %v306 = vld [vmem:[%s231 + $0xb8] sm:$0xff]
        %v307 = vld [vmem:[%s231 + $0xc0] sm:$0xff]
        %v308 = vld [vmem:[%s231 + $0xc8] sm:$0xff]
        %v309 = vld [vmem:[%s231 + $0xd0] sm:$0xff]
        %v310 = vld [vmem:[%s231 + $0xd8] sm:$0xff]
        %v311 = vld [vmem:[%s231 + $0xe0] sm:$0xff]
        %v312 = vld [vmem:[%s231 + $0xe8] sm:$0xff]
        %v313 = vld [vmem:[%s231 + $0xf0] sm:$0xff]
        %v314 = vld [vmem:[%s231 + $0xf8] sm:$0xff]
        %v315 = vld [vmem:[%s231 + $0x100] sm:$0xff]
        %v316 = vld [vmem:[%s231 + $0x108] sm:$0xff]
        %v317 = vld [vmem:[%s231 + $0x110] sm:$0xff]
        %v318 = vld [vmem:[%s231 + $0x118] sm:$0xff]
        %v319 = vld [vmem:[%s231 + $0x120] sm:$0xff]
        %v320 = vld [vmem:[%s231 + $0x128] sm:$0xff]
        %v321 = vld [vmem:[%s231 + $0x130] sm:$0xff]
        %v322 = vld [vmem:[%s231 + $0x138] sm:$0xff]
        %v323 = vld [vmem:[%s231 + $0x140] sm:$0xff]
        %v324 = vld [vmem:[%s231 + $0x148] sm:$0xff]
        %v325 = vld [vmem:[%s231 + $0x150] sm:$0xff]
        %v326 = vld [vmem:[%s231 + $0x158] sm:$0xff]
        %v327 = vld [vmem:[%s231 + $0x160] sm:$0xff]
        %v328 = vld [vmem:[%s231 + $0x168] sm:$0xff]
        %v329 = vld [vmem:[%s231 + $0x170] sm:$0xff]
        %v330 = vld [vmem:[%s231 + $0x178] sm:$0xff]
        %v331 = vld [vmem:[%s231 + $0x180] sm:$0xff]
        %v332 = vld [vmem:[%s231 + $0x188] sm:$0xff]
        %v333 = vld [vmem:[%s231 + $0x190] sm:$0xff]
        %v334 = vld [vmem:[%s231 + $0x198] sm:$0xff]
        %v335 = vld [vmem:[%s231 + $0x1a0] sm:$0xff]
        %v336 = vld [vmem:[%s231 + $0x1a8] sm:$0xff]
        %v337 = vld [vmem:[%s231 + $0x1b0] sm:$0xff]
        %v338 = vld [vmem:[%s231 + $0x1b8] sm:$0xff]
        %v339 = vld [vmem:[%s231 + $0x1c0] sm:$0xff]
        %v340 = vld [vmem:[%s231 + $0x1c8] sm:$0xff]
        %v341 = vld [vmem:[%s231 + $0x1d0] sm:$0xff]
        %v342 = vld [vmem:[%s231 + $0x1d8] sm:$0xff]
        %v343 = vld [vmem:[%s231 + $0x1e0] sm:$0xff]
        %v344 = vld [vmem:[%s231 + $0x1e8] sm:$0xff]
        %v345 = vld [vmem:[%s231 + $0x1f0] sm:$0xff]
        %v346 = vld [vmem:[%s231 + $0x1f8] sm:$0xff]
        %v347 = vld [vmem:[%s231 + $0x200] sm:$0xff]
        %v348 = vld [vmem:[%s231 + $0x208] sm:$0xff]
        %v349 = vld [vmem:[%s231 + $0x210] sm:$0xff]
        %v350 = vld [vmem:[%s231 + $0x218] sm:$0xff]
        %v351 = vld [vmem:[%s231 + $0x220] sm:$0xff]
        %v352 = vld [vmem:[%s231 + $0x228] sm:$0xff]
        %v353 = vld [vmem:[%s231 + $0x230] sm:$0xff]
        %v354 = vld [vmem:[%s231 + $0x238] sm:$0xff]
        %v355 = vld [vmem:[%s231 + $0x240] sm:$0xff]
        %v356 = vld [vmem:[%s231 + $0x248] sm:$0xff]
        %v357 = vld [vmem:[%s231 + $0x250] sm:$0xff]
        %v358 = vld [vmem:[%s231 + $0x258] sm:$0xff]
        %v359 = vld [vmem:[%s231 + $0x260] sm:$0xff]
        %v360 = vld [vmem:[%s231 + $0x268] sm:$0xff]
        %v361 = vld [vmem:[%s231 + $0x270] sm:$0xff]
        %v362 = vld [vmem:[%s231 + $0x278] sm:$0xff]
        %v363 = vld [vmem:[%s231 + $0x280] sm:$0xff]
        %v364 = vld [vmem:[%s231 + $0x288] sm:$0xff]
        %v365 = vld [vmem:[%s231 + $0x290] sm:$0xff]
        %v366 = vld [vmem:[%s231 + $0x298] sm:$0xff]
        %v367 = vld [vmem:[%s231 + $0x2a0] sm:$0xff]
        %v368 = vld [vmem:[%s231 + $0x2a8] sm:$0xff]
        %v369 = vld [vmem:[%s231 + $0x2b0] sm:$0xff]
        %v370 = vld [vmem:[%s231 + $0x2b8] sm:$0xff]
        %v371 = vld [vmem:[%s231 + $0x2c0] sm:$0xff]
        %v372 = vld [vmem:[%s231 + $0x2c8] sm:$0xff]
        %v373 = vld [vmem:[%s231 + $0x2d0] sm:$0xff]
        %v374 = vpack.c.bf16 %v290, %v283
        %v375 = vpack.c.bf16 %v291, %v284
        %v376 = vpack.c.bf16 %v292, %v285
        %v377 = vpack.c.bf16 %v293, %v286
        %v378 = vpack.c.bf16 %v294, %v287
        %v379 = vpack.c.bf16 %v295, %v288
        %v380 = vpack.c.bf16 %v296, %v289
        %v381 = vpack.c.bf16 %v304, %v297
        %v382 = vpack.c.bf16 %v305, %v298
        %v383 = vpack.c.bf16 %v306, %v299
        %v384 = vpack.c.bf16 %v307, %v300
        %v385 = vpack.c.bf16 %v308, %v301
        %v386 = vpack.c.bf16 %v309, %v302
        %v387 = vpack.c.bf16 %v310, %v303
        %v388 = vpack.c.bf16 %v318, %v311
        %v389 = vpack.c.bf16 %v319, %v312
        %v390 = vpack.c.bf16 %v320, %v313
        %v391 = vpack.c.bf16 %v321, %v314
        %v392 = vpack.c.bf16 %v322, %v315
        %v393 = vpack.c.bf16 %v323, %v316
        %v394 = vpack.c.bf16 %v324, %v317
        %v395 = vpack.c.bf16 %v332, %v325
        %v396 = vpack.c.bf16 %v333, %v326
        %v397 = vpack.c.bf16 %v334, %v327
        %v398 = vpack.c.bf16 %v335, %v328
        %v399 = vpack.c.bf16 %v336, %v329
        %v400 = vpack.c.bf16 %v337, %v330
        %v401 = vpack.c.bf16 %v338, %v331
        %v402 = vpack.c.bf16 %v346, %v339
        %v403 = vpack.c.bf16 %v347, %v340
        %v404 = vpack.c.bf16 %v348, %v341
        %v405 = vpack.c.bf16 %v349, %v342
        %v406 = vpack.c.bf16 %v350, %v343
        %v407 = vpack.c.bf16 %v351, %v344
        %v408 = vpack.c.bf16 %v352, %v345
        %v409 = vpack.c.bf16 %v360, %v353
        %v410 = vpack.c.bf16 %v361, %v354
        %v411 = vpack.c.bf16 %v362, %v355
        %v412 = vpack.c.bf16 %v363, %v356
        %v413 = vpack.c.bf16 %v364, %v357
        %v414 = vpack.c.bf16 %v365, %v358
        %v415 = vpack.c.bf16 %v366, %v359
        %v416 = vpack.c.bf16 %v367, %v367
        %v417 = vpack.c.bf16 %v368, %v368
        %v418 = vpack.c.bf16 %v369, %v369
        %v419 = vpack.c.bf16 %v370, %v370
        %v420 = vpack.c.bf16 %v371, %v371
        %v421 = vpack.c.bf16 %v372, %v372
        %v422 = vpack.c.bf16 %v373, %v373
        %v423 = vld [vmem:[#allocation4] sm:$0xf]
        %v424 = vld [vmem:[#allocation4 + $0x4] sm:$0xf]
        %v425 = vld [vmem:[#allocation4 + $0x8] sm:$0xf]
        %v426 = vld [vmem:[#allocation4 + $0xc] sm:$0xf]
        %v427 = vld [vmem:[#allocation4 + $0x10] sm:$0xf]
        %v428 = vld [vmem:[#allocation4 + $0x14] sm:$0xf]
        %v429 = vld [vmem:[#allocation4 + $0x18] sm:$0xf]
        %v430 = vld [vmem:[#allocation4 + $0x1c] sm:$0xf]
        %v431 = vld [vmem:[#allocation4 + $0x20] sm:$0xf]
        %v432 = vld [vmem:[#allocation4 + $0x24] sm:$0xf]
        %v433 = vld [vmem:[#allocation4 + $0x28] sm:$0xf]
        %v434 = vld [vmem:[#allocation4 + $0x2c] sm:$0xf]
        %v435 = vld [vmem:[#allocation4 + $0x30] sm:$0xf]
        %v436 = vld [vmem:[#allocation4 + $0x34] sm:$0xf]
        %v437 = vld [vmem:[#allocation4 + $0x38] sm:$0xf]
        %v438 = vld [vmem:[#allocation4 + $0x3c] sm:$0xf]
        %v439 = vld [vmem:[#allocation4 + $0x40] sm:$0xf]
        %v440 = vld [vmem:[#allocation4 + $0x44] sm:$0xf]
        %v441 = vld [vmem:[#allocation4 + $0x48] sm:$0xf]
        %v442 = vld [vmem:[#allocation4 + $0x4c] sm:$0xf]
        %v443 = vld [vmem:[#allocation4 + $0x50] sm:$0xf]
        %v444 = vld [vmem:[#allocation4 + $0x54] sm:$0xf]
        %v445 = vld [vmem:[#allocation4 + $0x58] sm:$0xf]
        %v446 = vld [vmem:[#allocation4 + $0x5c] sm:$0xf]
        %v447 = vld [vmem:[#allocation4 + $0x60] sm:$0xf]
        %v448 = vld [vmem:[#allocation4 + $0x64] sm:$0xf]
        %v449 = vld [vmem:[#allocation4 + $0x68] sm:$0xf]
        %v450 = vld [vmem:[#allocation4 + $0x6c] sm:$0xf]
        %v451 = vld [vmem:[#allocation4 + $0x70] sm:$0xf]
        %v452 = vld [vmem:[#allocation4 + $0x74] sm:$0xf]
        %v453 = vld [vmem:[#allocation4 + $0x78] sm:$0xf]
        %v454 = vld [vmem:[#allocation4 + $0x7c] sm:$0xf]
        %v455 = vld [vmem:[#allocation4 + $0x80] sm:$0xf]
        %v456 = vld [vmem:[#allocation4 + $0x84] sm:$0xf]
        %v457 = vld [vmem:[#allocation4 + $0x88] sm:$0xf]
        %v458 = vld [vmem:[#allocation4 + $0x8c] sm:$0xf]
        %v459 = vld [vmem:[#allocation4 + $0x90] sm:$0xf]
        %v460 = vld [vmem:[#allocation4 + $0x94] sm:$0xf]
        %v461 = vld [vmem:[#allocation4 + $0x98] sm:$0xf]
        %v462 = vld [vmem:[#allocation4 + $0x9c] sm:$0xf]
        %v463 = vld [vmem:[#allocation4 + $0xa0] sm:$0xf]
        %v464 = vld [vmem:[#allocation4 + $0xa4] sm:$0xf]
        %v465 = vld [vmem:[#allocation4 + $0xa8] sm:$0xf]
        %v466 = vld [vmem:[#allocation4 + $0xac] sm:$0xf]
        %v467 = vld [vmem:[#allocation4 + $0xb0] sm:$0xf]
        %v468 = vld [vmem:[#allocation4 + $0xb4] sm:$0xf]
        %v469 = vld [vmem:[#allocation4 + $0xb8] sm:$0xf]
        %v470 = vld [vmem:[#allocation4 + $0xbc] sm:$0xf]
        %v471 = vld [vmem:[#allocation4 + $0xc0] sm:$0xf]
        %v472 = vld [vmem:[#allocation4 + $0xc4] sm:$0xf]
        %v473 = vld [vmem:[#allocation4 + $0xc8] sm:$0xf]
        %v474 = vld [vmem:[#allocation4 + $0xcc] sm:$0xf]
        %v475 = vld [vmem:[#allocation4 + $0xd0] sm:$0xf]
        %v476 = vld [vmem:[#allocation4 + $0xd4] sm:$0xf]
        %v477 = vld [vmem:[#allocation4 + $0xd8] sm:$0xf]
        %v478 = vld [vmem:[#allocation4 + $0xdc] sm:$0xf]
        %v479 = vld [vmem:[#allocation4 + $0xe0] sm:$0xf]
        %v480 = vld [vmem:[#allocation4 + $0xe4] sm:$0xf]
        %v481 = vld [vmem:[#allocation4 + $0xe8] sm:$0xf]
        %v482 = vld [vmem:[#allocation4 + $0xec] sm:$0xf]
        %v483 = vld [vmem:[#allocation4 + $0xf0] sm:$0xf]
        %v484 = vld [vmem:[#allocation4 + $0xf4] sm:$0xf]
        %v485 = vld [vmem:[#allocation4 + $0xf8] sm:$0xf]
        %v486 = vld [vmem:[#allocation4 + $0xfc] sm:$0xf]
        %v487 = vld [vmem:[#allocation4 + $0x100] sm:$0xf]
        %v488 = vld [vmem:[#allocation4 + $0x104] sm:$0xf]
        %v489 = vld [vmem:[#allocation4 + $0x108] sm:$0xf]
        %v490 = vld [vmem:[#allocation4 + $0x10c] sm:$0xf]
        %v491 = vld [vmem:[#allocation4 + $0x110] sm:$0xf]
        %v492 = vld [vmem:[#allocation4 + $0x114] sm:$0xf]
        %v493 = vld [vmem:[#allocation4 + $0x118] sm:$0xf]
        %v494 = vld [vmem:[#allocation4 + $0x11c] sm:$0xf]
        %v495 = vld [vmem:[#allocation4 + $0x120] sm:$0xf]
        %v496 = vld [vmem:[#allocation4 + $0x124] sm:$0xf]
        %v497 = vld [vmem:[#allocation4 + $0x128] sm:$0xf]
        %v498 = vld [vmem:[#allocation4 + $0x12c] sm:$0xf]
        %v499 = vld [vmem:[#allocation4 + $0x130] sm:$0xf]
        %v500 = vld [vmem:[#allocation4 + $0x134] sm:$0xf]
        %v501 = vld [vmem:[#allocation4 + $0x138] sm:$0xf]
        %v502 = vld [vmem:[#allocation4 + $0x13c] sm:$0xf]
        %v503 = vld [vmem:[#allocation4 + $0x140] sm:$0xf]
        %v504 = vld [vmem:[#allocation4 + $0x144] sm:$0xf]
        %v505 = vld [vmem:[#allocation4 + $0x148] sm:$0xf]
        %v506 = vld [vmem:[#allocation4 + $0x14c] sm:$0xf]
        %v507 = vld [vmem:[#allocation4 + $0x150] sm:$0xf]
        %v508 = vld [vmem:[#allocation4 + $0x154] sm:$0xf]
        %v509 = vld [vmem:[#allocation4 + $0x158] sm:$0xf]
        %v510 = vld [vmem:[#allocation4 + $0x15c] sm:$0xf]
        %v511 = vld [vmem:[#allocation4 + $0x160] sm:$0xf]
        %v512 = vld [vmem:[#allocation4 + $0x164] sm:$0xf]
        %v513 = vld [vmem:[#allocation4 + $0x168] sm:$0xf]
        %v514 = vld [vmem:[#allocation4 + $0x16c] sm:$0xf]
        %v515 = vld [vmem:[#allocation4 + $0x170] sm:$0xf]
        %v516 = vld [vmem:[#allocation4 + $0x174] sm:$0xf]
        %v517 = vld [vmem:[#allocation4 + $0x178] sm:$0xf]
        %v518 = vld [vmem:[#allocation4 + $0x17c] sm:$0xf]
        %v519 = vld [vmem:[#allocation4 + $0x180] sm:$0xf]
        %v520 = vld [vmem:[#allocation4 + $0x184] sm:$0xf]
        %v521 = vld [vmem:[#allocation7] sm:$0x1]
        %v522 = vperm.slane %v521, 0
        %v621 = vunpack.c.l.b16 %v423
        %v622 = vunpack.c.l.b16 %v424
        %v623 = vunpack.c.l.b16 %v425
        %v624 = vunpack.c.l.b16 %v426
        %v625 = vunpack.c.l.b16 %v427
        %v626 = vunpack.c.l.b16 %v428
        %v627 = vunpack.c.l.b16 %v429
        %v628 = vunpack.c.l.b16 %v430
        %v629 = vunpack.c.l.b16 %v431
        %v630 = vunpack.c.l.b16 %v432
        %v631 = vunpack.c.l.b16 %v433
        %v632 = vunpack.c.l.b16 %v434
        %v633 = vunpack.c.l.b16 %v435
        %v634 = vunpack.c.l.b16 %v436
        %v635 = vunpack.c.l.b16 %v437
        %v636 = vunpack.c.l.b16 %v438
        %v637 = vunpack.c.l.b16 %v439
        %v638 = vunpack.c.l.b16 %v440
        %v639 = vunpack.c.l.b16 %v441
        %v640 = vunpack.c.l.b16 %v442
        %v641 = vunpack.c.l.b16 %v443
        %v642 = vunpack.c.l.b16 %v444
        %v643 = vunpack.c.l.b16 %v445
        %v644 = vunpack.c.l.b16 %v446
        %v645 = vunpack.c.l.b16 %v447
        %v646 = vunpack.c.l.b16 %v448
        %v647 = vunpack.c.l.b16 %v449
        %v648 = vunpack.c.l.b16 %v450
        %v649 = vunpack.c.l.b16 %v451
        %v650 = vunpack.c.l.b16 %v452
        %v651 = vunpack.c.l.b16 %v453
        %v652 = vunpack.c.l.b16 %v454
        %v653 = vunpack.c.l.b16 %v455
        %v654 = vunpack.c.l.b16 %v456
        %v655 = vunpack.c.l.b16 %v457
        %v656 = vunpack.c.l.b16 %v458
        %v657 = vunpack.c.l.b16 %v459
        %v658 = vunpack.c.l.b16 %v460
        %v659 = vunpack.c.l.b16 %v461
        %v660 = vunpack.c.l.b16 %v462
        %v661 = vunpack.c.l.b16 %v463
        %v662 = vunpack.c.l.b16 %v464
        %v663 = vunpack.c.l.b16 %v465
        %v664 = vunpack.c.l.b16 %v466
        %v665 = vunpack.c.l.b16 %v467
        %v666 = vunpack.c.l.b16 %v468
        %v667 = vunpack.c.l.b16 %v469
        %v668 = vunpack.c.l.b16 %v470
        %v669 = vunpack.c.l.b16 %v471
        %v670 = vunpack.c.l.b16 %v472
        %v671 = vunpack.c.l.b16 %v473
        %v672 = vunpack.c.l.b16 %v474
        %v673 = vunpack.c.l.b16 %v475
        %v674 = vunpack.c.l.b16 %v476
        %v675 = vunpack.c.l.b16 %v477
        %v676 = vunpack.c.l.b16 %v478
        %v677 = vunpack.c.l.b16 %v479
        %v678 = vunpack.c.l.b16 %v480
        %v679 = vunpack.c.l.b16 %v481
        %v680 = vunpack.c.l.b16 %v482
        %v681 = vunpack.c.l.b16 %v483
        %v682 = vunpack.c.l.b16 %v484
        %v683 = vunpack.c.l.b16 %v485
        %v684 = vunpack.c.l.b16 %v486
        %v685 = vunpack.c.l.b16 %v487
        %v686 = vunpack.c.l.b16 %v488
        %v687 = vunpack.c.l.b16 %v489
        %v688 = vunpack.c.l.b16 %v490
        %v689 = vunpack.c.l.b16 %v491
        %v690 = vunpack.c.l.b16 %v492
        %v691 = vunpack.c.l.b16 %v493
        %v692 = vunpack.c.l.b16 %v494
        %v693 = vunpack.c.l.b16 %v495
        %v694 = vunpack.c.l.b16 %v496
        %v695 = vunpack.c.l.b16 %v497
        %v696 = vunpack.c.l.b16 %v498
        %v697 = vunpack.c.l.b16 %v499
        %v698 = vunpack.c.l.b16 %v500
        %v699 = vunpack.c.l.b16 %v501
        %v700 = vunpack.c.l.b16 %v502
        %v701 = vunpack.c.l.b16 %v503
        %v702 = vunpack.c.l.b16 %v504
        %v703 = vunpack.c.l.b16 %v505
        %v704 = vunpack.c.l.b16 %v506
        %v705 = vunpack.c.l.b16 %v507
        %v706 = vunpack.c.l.b16 %v508
        %v707 = vunpack.c.l.b16 %v509
        %v708 = vunpack.c.l.b16 %v510
        %v709 = vunpack.c.l.b16 %v511
        %v710 = vunpack.c.l.b16 %v512
        %v711 = vunpack.c.l.b16 %v513
        %v712 = vunpack.c.l.b16 %v514
        %v713 = vunpack.c.l.b16 %v515
        %v714 = vunpack.c.l.b16 %v516
        %v715 = vunpack.c.l.b16 %v517
        %v716 = vunpack.c.l.b16 %v518
        %v717 = vunpack.c.l.b16 %v519
        %v718 = vunpack.c.l.b16 %v520
        %v719 = vpack.c.b16 %v622, %v621
        %v720 = vpack.c.b16 %v624, %v623
        %v721 = vpack.c.b16 %v626, %v625
        %v722 = vpack.c.b16 %v628, %v627
        %v723 = vpack.c.b16 %v630, %v629
        %v724 = vpack.c.b16 %v632, %v631
        %v725 = vpack.c.b16 %v634, %v633
        %v726 = vpack.c.b16 %v636, %v635
        %v727 = vpack.c.b16 %v638, %v637
        %v728 = vpack.c.b16 %v640, %v639
        %v729 = vpack.c.b16 %v642, %v641
        %v730 = vpack.c.b16 %v644, %v643
        %v731 = vpack.c.b16 %v646, %v645
        %v732 = vpack.c.b16 %v648, %v647
        %v733 = vpack.c.b16 %v650, %v649
        %v734 = vpack.c.b16 %v652, %v651
        %v735 = vpack.c.b16 %v654, %v653
        %v736 = vpack.c.b16 %v656, %v655
        %v737 = vpack.c.b16 %v658, %v657
        %v738 = vpack.c.b16 %v660, %v659
        %v739 = vpack.c.b16 %v662, %v661
        %v740 = vpack.c.b16 %v664, %v663
        %v741 = vpack.c.b16 %v666, %v665
        %v742 = vpack.c.b16 %v668, %v667
        %v743 = vpack.c.b16 %v670, %v669
        %v744 = vpack.c.b16 %v672, %v671
        %v745 = vpack.c.b16 %v674, %v673
        %v746 = vpack.c.b16 %v676, %v675
        %v747 = vpack.c.b16 %v678, %v677
        %v748 = vpack.c.b16 %v680, %v679
        %v749 = vpack.c.b16 %v682, %v681
        %v750 = vpack.c.b16 %v684, %v683
        %v751 = vpack.c.b16 %v686, %v685
        %v752 = vpack.c.b16 %v688, %v687
        %v753 = vpack.c.b16 %v690, %v689
        %v754 = vpack.c.b16 %v692, %v691
        %v755 = vpack.c.b16 %v694, %v693
        %v756 = vpack.c.b16 %v696, %v695
        %v757 = vpack.c.b16 %v698, %v697
        %v758 = vpack.c.b16 %v700, %v699
        %v759 = vpack.c.b16 %v702, %v701
        %v760 = vpack.c.b16 %v704, %v703
        %v761 = vpack.c.b16 %v706, %v705
        %v762 = vpack.c.b16 %v708, %v707
        %v763 = vpack.c.b16 %v710, %v709
        %v764 = vpack.c.b16 %v712, %v711
        %v765 = vpack.c.b16 %v714, %v713
        %v766 = vpack.c.b16 %v716, %v715
        %v767 = vpack.c.b16 %v718, %v717
        %vm817 = vcmask 130048
        %v819 = vsel %vm817, %v380, 0
        %v822 = vsel %vm817, %v387, 0
        %v825 = vsel %vm817, %v394, 0
        %v828 = vsel %vm817, %v401, 0
        %v831 = vsel %vm817, %v408, 0
        %v834 = vsel %vm817, %v415, 0
        %v837 = vsel %vm817, %v422, 0
        %839 = vmatpush.bf16.msra.mxu0 %v726
        %840 = vmatpush.bf16.msra.mxu0 %v725
        %841 = vmatpush.bf16.msra.mxu0 %v724
        %842 = vmatpush.bf16.msra.mxu0 %v723
        %843 = vmatpush.bf16.msra.mxu0 %v722
        %844 = vmatpush.bf16.msra.mxu0 %v721
        %845 = vmatpush.bf16.msra.mxu0 %v720
        %846 = vmatpush.bf16.msra.mxu0 %v719
        %847 = vmatmul.bf16.gmra.mxu0 %v374
        %v848 = vpop.f32.mrf.mxu0
        %v849 = vadd.f32 %v522, %v848
        %v850 = vpop.f32.mrf.mxu0
        %v851 = vadd.f32 %v522, %v850
        %852 = vmatmul.bf16.gmra.mxu0 %v381
        %v853 = vpop.f32.mrf.mxu0
        %v854 = vadd.f32 %v522, %v853
        %v855 = vpop.f32.mrf.mxu0
        %v856 = vadd.f32 %v522, %v855
        %857 = vmatmul.bf16.gmra.mxu0 %v388
        %v858 = vpop.f32.mrf.mxu0
        %v859 = vadd.f32 %v522, %v858
        %v860 = vpop.f32.mrf.mxu0
        %v861 = vadd.f32 %v522, %v860
        %862 = vmatmul.bf16.gmra.mxu0 %v395
        %v863 = vpop.f32.mrf.mxu0
        %v864 = vadd.f32 %v522, %v863
        %v865 = vpop.f32.mrf.mxu0
        %v866 = vadd.f32 %v522, %v865
        %867 = vmatmul.bf16.gmra.mxu0 %v402
        %v868 = vpop.f32.mrf.mxu0
        %v869 = vadd.f32 %v522, %v868
        %v870 = vpop.f32.mrf.mxu0
        %v871 = vadd.f32 %v522, %v870
        %872 = vmatmul.bf16.gmra.mxu0 %v409
        %v873 = vpop.f32.mrf.mxu0
        %v874 = vadd.f32 %v522, %v873
        %v875 = vpop.f32.mrf.mxu0
        %v876 = vadd.f32 %v522, %v875
        %877 = vmatmul.bf16.gmra.mxu0 %v416
        %v878 = vpop.f32.mrf.mxu0
        %v879 = vadd.f32 %v522, %v878
        %v880 = vpop.f32.mrf.mxu0
        %881 = vdwg.mxu0
        %882 = vmatpush.bf16.msra.mxu0 %v734
        %883 = vmatpush.bf16.msra.mxu0 %v733
        %884 = vmatpush.bf16.msra.mxu0 %v732
        %885 = vmatpush.bf16.msra.mxu0 %v731
        %886 = vmatpush.bf16.msra.mxu0 %v730
        %887 = vmatpush.bf16.msra.mxu0 %v729
        %888 = vmatpush.bf16.msra.mxu0 %v728
        %889 = vmatpush.bf16.msra.mxu0 %v727
        %890 = vmatmul.bf16.gmra.mxu0 %v375
        %v891 = vpop.f32.mrf.mxu0
        %v892 = vadd.f32 %v849, %v891
        %v893 = vpop.f32.mrf.mxu0
        %v894 = vadd.f32 %v851, %v893
        %895 = vmatmul.bf16.gmra.mxu0 %v382
        %v896 = vpop.f32.mrf.mxu0
        %v897 = vadd.f32 %v854, %v896
        %v898 = vpop.f32.mrf.mxu0
        %v899 = vadd.f32 %v856, %v898
        %900 = vmatmul.bf16.gmra.mxu0 %v389
        %v901 = vpop.f32.mrf.mxu0
        %v902 = vadd.f32 %v859, %v901
        %v903 = vpop.f32.mrf.mxu0
        %v904 = vadd.f32 %v861, %v903
        %905 = vmatmul.bf16.gmra.mxu0 %v396
        %v906 = vpop.f32.mrf.mxu0
        %v907 = vadd.f32 %v864, %v906
        %v908 = vpop.f32.mrf.mxu0
        %v909 = vadd.f32 %v866, %v908
        %910 = vmatmul.bf16.gmra.mxu0 %v403
        %v911 = vpop.f32.mrf.mxu0
        %v912 = vadd.f32 %v869, %v911
        %v913 = vpop.f32.mrf.mxu0
        %v914 = vadd.f32 %v871, %v913
        %915 = vmatmul.bf16.gmra.mxu0 %v410
        %v916 = vpop.f32.mrf.mxu0
        %v917 = vadd.f32 %v874, %v916
        %v918 = vpop.f32.mrf.mxu0
        %v919 = vadd.f32 %v876, %v918
        %920 = vmatmul.bf16.gmra.mxu0 %v417
        %v921 = vpop.f32.mrf.mxu0
        %v922 = vadd.f32 %v879, %v921
        %v923 = vpop.f32.mrf.mxu0
        %924 = vdwg.mxu0
        %925 = vmatpush.bf16.msra.mxu0 %v742
        %926 = vmatpush.bf16.msra.mxu0 %v741
        %927 = vmatpush.bf16.msra.mxu0 %v740
        %928 = vmatpush.bf16.msra.mxu0 %v739
        %929 = vmatpush.bf16.msra.mxu0 %v738
        %930 = vmatpush.bf16.msra.mxu0 %v737
        %931 = vmatpush.bf16.msra.mxu0 %v736
        %932 = vmatpush.bf16.msra.mxu0 %v735
        %933 = vmatmul.bf16.gmra.mxu0 %v376
        %v934 = vpop.f32.mrf.mxu0
        %v935 = vadd.f32 %v892, %v934
        %v936 = vpop.f32.mrf.mxu0
        %v937 = vadd.f32 %v894, %v936
        %938 = vmatmul.bf16.gmra.mxu0 %v383
        %v939 = vpop.f32.mrf.mxu0
        %v940 = vadd.f32 %v897, %v939
        %v941 = vpop.f32.mrf.mxu0
        %v942 = vadd.f32 %v899, %v941
        %943 = vmatmul.bf16.gmra.mxu0 %v390
        %v944 = vpop.f32.mrf.mxu0
        %v945 = vadd.f32 %v902, %v944
        %v946 = vpop.f32.mrf.mxu0
        %v947 = vadd.f32 %v904, %v946
        %948 = vmatmul.bf16.gmra.mxu0 %v397
        %v949 = vpop.f32.mrf.mxu0
        %v950 = vadd.f32 %v907, %v949
        %v951 = vpop.f32.mrf.mxu0
        %v952 = vadd.f32 %v909, %v951
        %953 = vmatmul.bf16.gmra.mxu0 %v404
        %v954 = vpop.f32.mrf.mxu0
        %v955 = vadd.f32 %v912, %v954
        %v956 = vpop.f32.mrf.mxu0
        %v957 = vadd.f32 %v914, %v956
        %958 = vmatmul.bf16.gmra.mxu0 %v411
        %v959 = vpop.f32.mrf.mxu0
        %v960 = vadd.f32 %v917, %v959
        %v961 = vpop.f32.mrf.mxu0
        %v962 = vadd.f32 %v919, %v961
        %963 = vmatmul.bf16.gmra.mxu0 %v418
        %v964 = vpop.f32.mrf.mxu0
        %v965 = vadd.f32 %v922, %v964
        %v966 = vpop.f32.mrf.mxu0
        %967 = vdwg.mxu0
        %968 = vmatpush.bf16.msra.mxu0 %v750
        %969 = vmatpush.bf16.msra.mxu0 %v749
        %970 = vmatpush.bf16.msra.mxu0 %v748
        %971 = vmatpush.bf16.msra.mxu0 %v747
        %972 = vmatpush.bf16.msra.mxu0 %v746
        %973 = vmatpush.bf16.msra.mxu0 %v745
        %974 = vmatpush.bf16.msra.mxu0 %v744
        %975 = vmatpush.bf16.msra.mxu0 %v743
        %976 = vmatmul.bf16.gmra.mxu0 %v377
        %v977 = vpop.f32.mrf.mxu0
        %v978 = vadd.f32 %v935, %v977
        %v979 = vpop.f32.mrf.mxu0
        %v980 = vadd.f32 %v937, %v979
        %981 = vmatmul.bf16.gmra.mxu0 %v384
        %v982 = vpop.f32.mrf.mxu0
        %v983 = vadd.f32 %v940, %v982
        %v984 = vpop.f32.mrf.mxu0
        %v985 = vadd.f32 %v942, %v984
        %986 = vmatmul.bf16.gmra.mxu0 %v391
        %v987 = vpop.f32.mrf.mxu0
        %v988 = vadd.f32 %v945, %v987
        %v989 = vpop.f32.mrf.mxu0
        %v990 = vadd.f32 %v947, %v989
        %991 = vmatmul.bf16.gmra.mxu0 %v398
        %v992 = vpop.f32.mrf.mxu0
        %v993 = vadd.f32 %v950, %v992
        %v994 = vpop.f32.mrf.mxu0
        %v995 = vadd.f32 %v952, %v994
        %996 = vmatmul.bf16.gmra.mxu0 %v405
        %v997 = vpop.f32.mrf.mxu0
        %v998 = vadd.f32 %v955, %v997
        %v999 = vpop.f32.mrf.mxu0
        %v1000 = vadd.f32 %v957, %v999
        %1001 = vmatmul.bf16.gmra.mxu0 %v412
        %v1002 = vpop.f32.mrf.mxu0
        %v1003 = vadd.f32 %v960, %v1002
        %v1004 = vpop.f32.mrf.mxu0
        %v1005 = vadd.f32 %v962, %v1004
        %1006 = vmatmul.bf16.gmra.mxu0 %v419
        %v1007 = vpop.f32.mrf.mxu0
        %v1008 = vadd.f32 %v965, %v1007
        %v1009 = vpop.f32.mrf.mxu0
        %1010 = vdwg.mxu0
        %1011 = vmatpush.bf16.msra.mxu0 %v758
        %1012 = vmatpush.bf16.msra.mxu0 %v757
        %1013 = vmatpush.bf16.msra.mxu0 %v756
        %1014 = vmatpush.bf16.msra.mxu0 %v755
        %1015 = vmatpush.bf16.msra.mxu0 %v754
        %1016 = vmatpush.bf16.msra.mxu0 %v753
        %1017 = vmatpush.bf16.msra.mxu0 %v752
        %1018 = vmatpush.bf16.msra.mxu0 %v751
        %1019 = vmatmul.bf16.gmra.mxu0 %v378
        %v1020 = vpop.f32.mrf.mxu0
        %v1021 = vadd.f32 %v978, %v1020
        %v1022 = vpop.f32.mrf.mxu0
        %v1023 = vadd.f32 %v980, %v1022
        %1024 = vmatmul.bf16.gmra.mxu0 %v385
        %v1025 = vpop.f32.mrf.mxu0
        %v1026 = vadd.f32 %v983, %v1025
        %v1027 = vpop.f32.mrf.mxu0
        %v1028 = vadd.f32 %v985, %v1027
        %1029 = vmatmul.bf16.gmra.mxu0 %v392
        %v1030 = vpop.f32.mrf.mxu0
        %v1031 = vadd.f32 %v988, %v1030
        %v1032 = vpop.f32.mrf.mxu0
        %v1033 = vadd.f32 %v990, %v1032
        %1034 = vmatmul.bf16.gmra.mxu0 %v399
        %v1035 = vpop.f32.mrf.mxu0
        %v1036 = vadd.f32 %v993, %v1035
        %v1037 = vpop.f32.mrf.mxu0
        %v1038 = vadd.f32 %v995, %v1037
        %1039 = vmatmul.bf16.gmra.mxu0 %v406
        %v1040 = vpop.f32.mrf.mxu0
        %v1041 = vadd.f32 %v998, %v1040
        %v1042 = vpop.f32.mrf.mxu0
        %v1043 = vadd.f32 %v1000, %v1042
        %1044 = vmatmul.bf16.gmra.mxu0 %v413
        %v1045 = vpop.f32.mrf.mxu0
        %v1046 = vadd.f32 %v1003, %v1045
        %v1047 = vpop.f32.mrf.mxu0
        %v1048 = vadd.f32 %v1005, %v1047
        %1049 = vmatmul.bf16.gmra.mxu0 %v420
        %v1050 = vpop.f32.mrf.mxu0
        %v1051 = vadd.f32 %v1008, %v1050
        %v1052 = vpop.f32.mrf.mxu0
        %1053 = vdwg.mxu0
        %1054 = vmatpush.bf16.msra.mxu0 %v766
        %1055 = vmatpush.bf16.msra.mxu0 %v765
        %1056 = vmatpush.bf16.msra.mxu0 %v764
        %1057 = vmatpush.bf16.msra.mxu0 %v763
        %1058 = vmatpush.bf16.msra.mxu0 %v762
        %1059 = vmatpush.bf16.msra.mxu0 %v761
        %1060 = vmatpush.bf16.msra.mxu0 %v760
        %1061 = vmatpush.bf16.msra.mxu0 %v759
        %1062 = vmatmul.bf16.gmra.mxu0 %v379
        %v1063 = vpop.f32.mrf.mxu0
        %v1064 = vadd.f32 %v1021, %v1063
        %v1065 = vpop.f32.mrf.mxu0
        %v1066 = vadd.f32 %v1023, %v1065
        %1067 = vmatmul.bf16.gmra.mxu0 %v386
        %v1068 = vpop.f32.mrf.mxu0
        %v1069 = vadd.f32 %v1026, %v1068
        %v1070 = vpop.f32.mrf.mxu0
        %v1071 = vadd.f32 %v1028, %v1070
        %1072 = vmatmul.bf16.gmra.mxu0 %v393
        %v1073 = vpop.f32.mrf.mxu0
        %v1074 = vadd.f32 %v1031, %v1073
        %v1075 = vpop.f32.mrf.mxu0
        %v1076 = vadd.f32 %v1033, %v1075
        %1077 = vmatmul.bf16.gmra.mxu0 %v400
        %v1078 = vpop.f32.mrf.mxu0
        %v1079 = vadd.f32 %v1036, %v1078
        %v1080 = vpop.f32.mrf.mxu0
        %v1081 = vadd.f32 %v1038, %v1080
        %1082 = vmatmul.bf16.gmra.mxu0 %v407
        %v1083 = vpop.f32.mrf.mxu0
        %v1084 = vadd.f32 %v1041, %v1083
        %v1085 = vpop.f32.mrf.mxu0
        %v1086 = vadd.f32 %v1043, %v1085
        %1087 = vmatmul.bf16.gmra.mxu0 %v414
        %v1088 = vpop.f32.mrf.mxu0
        %v1089 = vadd.f32 %v1046, %v1088
        %v1090 = vpop.f32.mrf.mxu0
        %v1091 = vadd.f32 %v1048, %v1090
        %1092 = vmatmul.bf16.gmra.mxu0 %v421
        %v1093 = vpop.f32.mrf.mxu0
        %v1094 = vadd.f32 %v1051, %v1093
        %v1095 = vpop.f32.mrf.mxu0
        %1096 = vdwg.mxu0
        %1097 = vmatpush.bf16.msra.mxu0 0
        %1098 = vmatpush.bf16.msra.mxu0 0
        %1099 = vmatpush.bf16.msra.mxu0 0
        %1100 = vmatpush.bf16.msra.mxu0 0
        %1101 = vmatpush.bf16.msra.mxu0 0
        %1102 = vmatpush.bf16.msra.mxu0 0
        %1103 = vmatpush.bf16.msra.mxu0 0
        %1104 = vmatpush.bf16.msra.mxu0 %v767
        %1105 = vmatmul.bf16.gmra.mxu0 %v819
        %v1106 = vpop.f32.mrf.mxu0
        %v1107 = vadd.f32 %v1064, %v1106
        %v1108 = vpop.f32.mrf.mxu0
        %v1109 = vadd.f32 %v1066, %v1108
        %1110 = vmatmul.bf16.gmra.mxu0 %v822
        %v1111 = vpop.f32.mrf.mxu0
        %v1112 = vadd.f32 %v1069, %v1111
        %v1113 = vpop.f32.mrf.mxu0
        %v1114 = vadd.f32 %v1071, %v1113
        %1115 = vmatmul.bf16.gmra.mxu0 %v825
        %v1116 = vpop.f32.mrf.mxu0
        %v1117 = vadd.f32 %v1074, %v1116
        %v1118 = vpop.f32.mrf.mxu0
        %v1119 = vadd.f32 %v1076, %v1118
        %1120 = vmatmul.bf16.gmra.mxu0 %v828
        %v1121 = vpop.f32.mrf.mxu0
        %v1122 = vadd.f32 %v1079, %v1121
        %v1123 = vpop.f32.mrf.mxu0
        %v1124 = vadd.f32 %v1081, %v1123
        %1125 = vmatmul.bf16.gmra.mxu0 %v831
        %v1126 = vpop.f32.mrf.mxu0
        %v1127 = vadd.f32 %v1084, %v1126
        %v1128 = vpop.f32.mrf.mxu0
        %v1129 = vadd.f32 %v1086, %v1128
        %1130 = vmatmul.bf16.gmra.mxu0 %v834
        %v1131 = vpop.f32.mrf.mxu0
        %v1132 = vadd.f32 %v1089, %v1131
        %v1133 = vpop.f32.mrf.mxu0
        %v1134 = vadd.f32 %v1091, %v1133
        %1135 = vmatmul.bf16.gmra.mxu0 %v837
        %v1136 = vpop.f32.mrf.mxu0
        %v1137 = vadd.f32 %v1094, %v1136
        %v1138 = vpop.f32.mrf.mxu0
        %1139 = vdwg.mxu0
        %v1140 = vpack.c.bf16 %v1109, %v1107
        %v1141 = vpack.c.bf16 %v1114, %v1112
        %v1142 = vpack.c.bf16 %v1119, %v1117
        %v1143 = vpack.c.bf16 %v1124, %v1122
        %v1144 = vpack.c.bf16 %v1129, %v1127
        %v1145 = vpack.c.bf16 %v1134, %v1132
        %v1146 = vpack.c.bf16 %v1137, %v1137
        %v1147 = vunpack.c.l.bf16 %v1140
        %v1148 = vunpack.c.h.bf16 %v1140
        %v1149 = vunpack.c.l.bf16 %v1141
        %v1150 = vunpack.c.h.bf16 %v1141
        %v1151 = vunpack.c.l.bf16 %v1142
        %v1152 = vunpack.c.h.bf16 %v1142
        %v1153 = vunpack.c.l.bf16 %v1143
        %v1154 = vunpack.c.h.bf16 %v1143
        %v1155 = vunpack.c.l.bf16 %v1144
        %v1156 = vunpack.c.h.bf16 %v1144
        %v1157 = vunpack.c.l.bf16 %v1145
        %v1158 = vunpack.c.h.bf16 %v1145
        %v1159 = vunpack.c.l.bf16 %v1146
        %v1160 = vtanh.pop %v1147
        %v1161 = vtanh.pop %v1148
        %v1162 = vtanh.pop %v1149
        %v1163 = vtanh.pop %v1150
        %v1164 = vtanh.pop %v1151
        %v1165 = vtanh.pop %v1152
        %v1166 = vtanh.pop %v1153
        %v1167 = vtanh.pop %v1154
        %v1168 = vtanh.pop %v1155
        %v1169 = vtanh.pop %v1156
        %v1170 = vtanh.pop %v1157
        %v1171 = vtanh.pop %v1158
        %v1172 = vtanh.pop %v1159
        %v1173 = vpack.c.bf16 %v1161, %v1160
        %v1174 = vpack.c.bf16 %v1163, %v1162
        %v1175 = vpack.c.bf16 %v1165, %v1164
        %v1176 = vpack.c.bf16 %v1167, %v1166
        %v1177 = vpack.c.bf16 %v1169, %v1168
        %v1178 = vpack.c.bf16 %v1171, %v1170
        %v1179 = vpack.c.bf16 %v1172, %v1172
        %v1180 = vld [vmem:[#allocation6] sm:$0xf]
        %v1181 = vld [vmem:[#allocation6 + $0x4] sm:$0xf]
        %v1182 = vld [vmem:[#allocation6 + $0x8] sm:$0xf]
        %v1183 = vld [vmem:[#allocation6 + $0xc] sm:$0xf]
        %v1184 = vld [vmem:[#allocation6 + $0x10] sm:$0xf]
        %v1185 = vld [vmem:[#allocation6 + $0x14] sm:$0xf]
        %v1186 = vld [vmem:[#allocation6 + $0x18] sm:$0xf]
        %v1187 = vld [vmem:[#allocation6 + $0x1c] sm:$0xf]
        %v1188 = vld [vmem:[#allocation6 + $0x20] sm:$0xf]
        %v1189 = vld [vmem:[#allocation6 + $0x24] sm:$0xf]
        %v1190 = vld [vmem:[#allocation6 + $0x28] sm:$0xf]
        %v1191 = vld [vmem:[#allocation6 + $0x2c] sm:$0xf]
        %v1192 = vld [vmem:[#allocation6 + $0x30] sm:$0xf]
        %v1193 = vld [vmem:[#allocation6 + $0x34] sm:$0xf]
        %v1194 = vld [vmem:[#allocation6 + $0x38] sm:$0xf]
        %v1195 = vld [vmem:[#allocation6 + $0x3c] sm:$0xf]
        %v1196 = vld [vmem:[#allocation7 + $0x1] sm:$0x1]
        %v1197 = vperm.slane %v1196, 0
        %v1214 = vunpack.c.l.b16 %v1180
        %v1215 = vunpack.c.l.b16 %v1181
        %v1216 = vunpack.c.l.b16 %v1182
        %v1217 = vunpack.c.l.b16 %v1183
        %v1218 = vunpack.c.l.b16 %v1184
        %v1219 = vunpack.c.l.b16 %v1185
        %v1220 = vunpack.c.l.b16 %v1186
        %v1221 = vunpack.c.l.b16 %v1187
        %v1222 = vunpack.c.l.b16 %v1188
        %v1223 = vunpack.c.l.b16 %v1189
        %v1224 = vunpack.c.l.b16 %v1190
        %v1225 = vunpack.c.l.b16 %v1191
        %v1226 = vunpack.c.l.b16 %v1192
        %v1227 = vunpack.c.l.b16 %v1193
        %v1228 = vunpack.c.l.b16 %v1194
        %v1229 = vunpack.c.l.b16 %v1195
        %v1230 = vpack.c.b16 %v1215, %v1214
        %v1231 = vpack.c.b16 %v1217, %v1216
        %v1232 = vpack.c.b16 %v1219, %v1218
        %v1233 = vpack.c.b16 %v1221, %v1220
        %v1234 = vpack.c.b16 %v1223, %v1222
        %v1235 = vpack.c.b16 %v1225, %v1224
        %v1236 = vpack.c.b16 %v1227, %v1226
        %v1237 = vpack.c.b16 %v1229, %v1228
        %1246 = vmatpush.bf16.msra.mxu0 %v1237
        %1247 = vmatpush.bf16.msra.mxu0 %v1236
        %1248 = vmatpush.bf16.msra.mxu0 %v1235
        %1249 = vmatpush.bf16.msra.mxu0 %v1234
        %1250 = vmatpush.bf16.msra.mxu0 %v1233
        %1251 = vmatpush.bf16.msra.mxu0 %v1232
        %1252 = vmatpush.bf16.msra.mxu0 %v1231
        %1253 = vmatpush.bf16.msra.mxu0 %v1230
        %1254 = vmatmul.bf16.gmra.mxu0 %v1173
        %v1255 = vpop.f32.mrf.mxu0
        %v1256 = vadd.f32 %v1197, %v1255
        %v1257 = vpop.f32.mrf.mxu0
        %v1258 = vadd.f32 %v1197, %v1257
        %1259 = vmatmul.bf16.gmra.mxu0 %v1174
        %v1260 = vpop.f32.mrf.mxu0
        %v1261 = vadd.f32 %v1197, %v1260
        %v1262 = vpop.f32.mrf.mxu0
        %v1263 = vadd.f32 %v1197, %v1262
        %1264 = vmatmul.bf16.gmra.mxu0 %v1175
        %v1265 = vpop.f32.mrf.mxu0
        %v1266 = vadd.f32 %v1197, %v1265
        %v1267 = vpop.f32.mrf.mxu0
        %v1268 = vadd.f32 %v1197, %v1267
        %1269 = vmatmul.bf16.gmra.mxu0 %v1176
        %v1270 = vpop.f32.mrf.mxu0
        %v1271 = vadd.f32 %v1197, %v1270
        %v1272 = vpop.f32.mrf.mxu0
        %v1273 = vadd.f32 %v1197, %v1272
        %1274 = vmatmul.bf16.gmra.mxu0 %v1177
        %v1275 = vpop.f32.mrf.mxu0
        %v1276 = vadd.f32 %v1197, %v1275
        %v1277 = vpop.f32.mrf.mxu0
        %v1278 = vadd.f32 %v1197, %v1277
        %1279 = vmatmul.bf16.gmra.mxu0 %v1178
        %v1280 = vpop.f32.mrf.mxu0
        %v1281 = vadd.f32 %v1197, %v1280
        %v1282 = vpop.f32.mrf.mxu0
        %v1283 = vadd.f32 %v1197, %v1282
        %1284 = vmatmul.bf16.gmra.mxu0 %v1179
        %v1285 = vpop.f32.mrf.mxu0
        %v1286 = vadd.f32 %v1197, %v1285
        %v1287 = vpop.f32.mrf.mxu0
        %1288 = vdwg.mxu0
        %v1289 = vpack.c.bf16 %v1258, %v1256
        %v1290 = vpack.c.bf16 %v1263, %v1261
        %v1291 = vpack.c.bf16 %v1268, %v1266
        %v1292 = vpack.c.bf16 %v1273, %v1271
        %v1293 = vpack.c.bf16 %v1278, %v1276
        %v1294 = vpack.c.bf16 %v1283, %v1281
        %v1295 = vpack.c.bf16 %v1286, %v1286
        %v1296 = vunpack.c.l.bf16 %v1289
        %v1297 = vunpack.c.h.bf16 %v1289
        %v1298 = vunpack.c.l.bf16 %v1290
        %v1299 = vunpack.c.h.bf16 %v1290
        %v1300 = vunpack.c.l.bf16 %v1291
        %v1301 = vunpack.c.h.bf16 %v1291
        %v1302 = vunpack.c.l.bf16 %v1292
        %v1303 = vunpack.c.h.bf16 %v1292
        %v1304 = vunpack.c.l.bf16 %v1293
        %v1305 = vunpack.c.h.bf16 %v1293
        %v1306 = vunpack.c.l.bf16 %v1294
        %v1307 = vunpack.c.h.bf16 %v1294
        %v1308 = vunpack.c.l.bf16 %v1295
        %v1309 = vtanh.pop %v1296
        %v1310 = vtanh.pop %v1297
        %v1311 = vtanh.pop %v1298
        %v1312 = vtanh.pop %v1299
        %v1313 = vtanh.pop %v1300
        %v1314 = vtanh.pop %v1301
        %v1315 = vtanh.pop %v1302
        %v1316 = vtanh.pop %v1303
        %v1317 = vtanh.pop %v1304
        %v1318 = vtanh.pop %v1305
        %v1319 = vtanh.pop %v1306
        %v1320 = vtanh.pop %v1307
        %v1321 = vtanh.pop %v1308
        %v1322 = vpack.c.bf16 %v1310, %v1309
        %v1323 = vpack.c.bf16 %v1312, %v1311
        %v1324 = vpack.c.bf16 %v1314, %v1313
        %v1325 = vpack.c.bf16 %v1316, %v1315
        %v1326 = vpack.c.bf16 %v1318, %v1317
        %v1327 = vpack.c.bf16 %v1320, %v1319
        %v1328 = vpack.c.bf16 %v1321, %v1321
        %s1329 = scalar_lea.vmem [#allocation6], 64
        %v1330 = vld [vmem:[%s1329] sm:$0xf]
        %v1331 = vld [vmem:[%s1329 + $0x4] sm:$0xf]
        %v1332 = vld [vmem:[%s1329 + $0x8] sm:$0xf]
        %v1333 = vld [vmem:[%s1329 + $0xc] sm:$0xf]
        %v1334 = vld [vmem:[%s1329 + $0x10] sm:$0xf]
        %v1335 = vld [vmem:[%s1329 + $0x14] sm:$0xf]
        %v1336 = vld [vmem:[%s1329 + $0x18] sm:$0xf]
        %v1337 = vld [vmem:[%s1329 + $0x1c] sm:$0xf]
        %v1338 = vld [vmem:[%s1329 + $0x20] sm:$0xf]
        %v1339 = vld [vmem:[%s1329 + $0x24] sm:$0xf]
        %v1340 = vld [vmem:[%s1329 + $0x28] sm:$0xf]
        %v1341 = vld [vmem:[%s1329 + $0x2c] sm:$0xf]
        %v1342 = vld [vmem:[%s1329 + $0x30] sm:$0xf]
        %v1343 = vld [vmem:[%s1329 + $0x34] sm:$0xf]
        %v1344 = vld [vmem:[%s1329 + $0x38] sm:$0xf]
        %v1345 = vld [vmem:[%s1329 + $0x3c] sm:$0xf]
        %v1346 = vld [vmem:[#allocation7 + $0x2] sm:$0x1]
        %v1347 = vperm.slane %v1346, 0
        %v1364 = vunpack.c.l.b16 %v1330
        %v1365 = vunpack.c.l.b16 %v1331
        %v1366 = vunpack.c.l.b16 %v1332
        %v1367 = vunpack.c.l.b16 %v1333
        %v1368 = vunpack.c.l.b16 %v1334
        %v1369 = vunpack.c.l.b16 %v1335
        %v1370 = vunpack.c.l.b16 %v1336
        %v1371 = vunpack.c.l.b16 %v1337
        %v1372 = vunpack.c.l.b16 %v1338
        %v1373 = vunpack.c.l.b16 %v1339
        %v1374 = vunpack.c.l.b16 %v1340
        %v1375 = vunpack.c.l.b16 %v1341
        %v1376 = vunpack.c.l.b16 %v1342
        %v1377 = vunpack.c.l.b16 %v1343
        %v1378 = vunpack.c.l.b16 %v1344
        %v1379 = vunpack.c.l.b16 %v1345
        %v1380 = vpack.c.b16 %v1365, %v1364
        %v1381 = vpack.c.b16 %v1367, %v1366
        %v1382 = vpack.c.b16 %v1369, %v1368
        %v1383 = vpack.c.b16 %v1371, %v1370
        %v1384 = vpack.c.b16 %v1373, %v1372
        %v1385 = vpack.c.b16 %v1375, %v1374
        %v1386 = vpack.c.b16 %v1377, %v1376
        %v1387 = vpack.c.b16 %v1379, %v1378
        %1396 = vmatpush.bf16.msra.mxu0 %v1387
        %1397 = vmatpush.bf16.msra.mxu0 %v1386
        %1398 = vmatpush.bf16.msra.mxu0 %v1385
        %1399 = vmatpush.bf16.msra.mxu0 %v1384
        %1400 = vmatpush.bf16.msra.mxu0 %v1383
        %1401 = vmatpush.bf16.msra.mxu0 %v1382
        %1402 = vmatpush.bf16.msra.mxu0 %v1381
        %1403 = vmatpush.bf16.msra.mxu0 %v1380
        %1404 = vmatmul.bf16.gmra.mxu0 %v1322
        %v1405 = vpop.f32.mrf.mxu0
        %v1406 = vadd.f32 %v1347, %v1405
        %v1407 = vpop.f32.mrf.mxu0
        %v1408 = vadd.f32 %v1347, %v1407
        %1409 = vmatmul.bf16.gmra.mxu0 %v1323
        %v1410 = vpop.f32.mrf.mxu0
        %v1411 = vadd.f32 %v1347, %v1410
        %v1412 = vpop.f32.mrf.mxu0
        %v1413 = vadd.f32 %v1347, %v1412
        %1414 = vmatmul.bf16.gmra.mxu0 %v1324
        %v1415 = vpop.f32.mrf.mxu0
        %v1416 = vadd.f32 %v1347, %v1415
        %v1417 = vpop.f32.mrf.mxu0
        %v1418 = vadd.f32 %v1347, %v1417
        %1419 = vmatmul.bf16.gmra.mxu0 %v1325
        %v1420 = vpop.f32.mrf.mxu0
        %v1421 = vadd.f32 %v1347, %v1420
        %v1422 = vpop.f32.mrf.mxu0
        %v1423 = vadd.f32 %v1347, %v1422
        %1424 = vmatmul.bf16.gmra.mxu0 %v1326
        %v1425 = vpop.f32.mrf.mxu0
        %v1426 = vadd.f32 %v1347, %v1425
        %v1427 = vpop.f32.mrf.mxu0
        %v1428 = vadd.f32 %v1347, %v1427
        %1429 = vmatmul.bf16.gmra.mxu0 %v1327
        %v1430 = vpop.f32.mrf.mxu0
        %v1431 = vadd.f32 %v1347, %v1430
        %v1432 = vpop.f32.mrf.mxu0
        %v1433 = vadd.f32 %v1347, %v1432
        %1434 = vmatmul.bf16.gmra.mxu0 %v1328
        %v1435 = vpop.f32.mrf.mxu0
        %v1436 = vadd.f32 %v1347, %v1435
        %v1437 = vpop.f32.mrf.mxu0
        %1438 = vdwg.mxu0
        %v1439 = vpack.c.bf16 %v1408, %v1406
        %v1440 = vpack.c.bf16 %v1413, %v1411
        %v1441 = vpack.c.bf16 %v1418, %v1416
        %v1442 = vpack.c.bf16 %v1423, %v1421
        %v1443 = vpack.c.bf16 %v1428, %v1426
        %v1444 = vpack.c.bf16 %v1433, %v1431
        %v1445 = vpack.c.bf16 %v1436, %v1436
        %v1446 = vunpack.c.l.bf16 %v1439
        %v1447 = vunpack.c.h.bf16 %v1439
        %v1448 = vunpack.c.l.bf16 %v1440
        %v1449 = vunpack.c.h.bf16 %v1440
        %v1450 = vunpack.c.l.bf16 %v1441
        %v1451 = vunpack.c.h.bf16 %v1441
        %v1452 = vunpack.c.l.bf16 %v1442
        %v1453 = vunpack.c.h.bf16 %v1442
        %v1454 = vunpack.c.l.bf16 %v1443
        %v1455 = vunpack.c.h.bf16 %v1443
        %v1456 = vunpack.c.l.bf16 %v1444
        %v1457 = vunpack.c.h.bf16 %v1444
        %v1458 = vunpack.c.l.bf16 %v1445
        %v1459 = vtanh.pop %v1446
        %v1460 = vtanh.pop %v1447
        %v1461 = vtanh.pop %v1448
        %v1462 = vtanh.pop %v1449
        %v1463 = vtanh.pop %v1450
        %v1464 = vtanh.pop %v1451
        %v1465 = vtanh.pop %v1452
        %v1466 = vtanh.pop %v1453
        %v1467 = vtanh.pop %v1454
        %v1468 = vtanh.pop %v1455
        %v1469 = vtanh.pop %v1456
        %v1470 = vtanh.pop %v1457
        %v1471 = vtanh.pop %v1458
        %v1472 = vpack.c.bf16 %v1460, %v1459
        %v1473 = vpack.c.bf16 %v1462, %v1461
        %v1474 = vpack.c.bf16 %v1464, %v1463
        %v1475 = vpack.c.bf16 %v1466, %v1465
        %v1476 = vpack.c.bf16 %v1468, %v1467
        %v1477 = vpack.c.bf16 %v1470, %v1469
        %v1478 = vpack.c.bf16 %v1471, %v1471
        %s1479 = scalar_lea.vmem [#allocation6], 128
        %v1480 = vld [vmem:[%s1479] sm:$0xf]
        %v1481 = vld [vmem:[%s1479 + $0x4] sm:$0xf]
        %v1482 = vld [vmem:[%s1479 + $0x8] sm:$0xf]
        %v1483 = vld [vmem:[%s1479 + $0xc] sm:$0xf]
        %v1484 = vld [vmem:[%s1479 + $0x10] sm:$0xf]
        %v1485 = vld [vmem:[%s1479 + $0x14] sm:$0xf]
        %v1486 = vld [vmem:[%s1479 + $0x18] sm:$0xf]
        %v1487 = vld [vmem:[%s1479 + $0x1c] sm:$0xf]
        %v1488 = vld [vmem:[%s1479 + $0x20] sm:$0xf]
        %v1489 = vld [vmem:[%s1479 + $0x24] sm:$0xf]
        %v1490 = vld [vmem:[%s1479 + $0x28] sm:$0xf]
        %v1491 = vld [vmem:[%s1479 + $0x2c] sm:$0xf]
        %v1492 = vld [vmem:[%s1479 + $0x30] sm:$0xf]
        %v1493 = vld [vmem:[%s1479 + $0x34] sm:$0xf]
        %v1494 = vld [vmem:[%s1479 + $0x38] sm:$0xf]
        %v1495 = vld [vmem:[%s1479 + $0x3c] sm:$0xf]
        %v1496 = vld [vmem:[#allocation7 + $0x3] sm:$0x1]
        %v1497 = vperm.slane %v1496, 0
        %v1514 = vunpack.c.l.b16 %v1480
        %v1515 = vunpack.c.l.b16 %v1481
        %v1516 = vunpack.c.l.b16 %v1482
        %v1517 = vunpack.c.l.b16 %v1483
        %v1518 = vunpack.c.l.b16 %v1484
        %v1519 = vunpack.c.l.b16 %v1485
        %v1520 = vunpack.c.l.b16 %v1486
        %v1521 = vunpack.c.l.b16 %v1487
        %v1522 = vunpack.c.l.b16 %v1488
        %v1523 = vunpack.c.l.b16 %v1489
        %v1524 = vunpack.c.l.b16 %v1490
        %v1525 = vunpack.c.l.b16 %v1491
        %v1526 = vunpack.c.l.b16 %v1492
        %v1527 = vunpack.c.l.b16 %v1493
        %v1528 = vunpack.c.l.b16 %v1494
        %v1529 = vunpack.c.l.b16 %v1495
        %v1530 = vpack.c.b16 %v1515, %v1514
        %v1531 = vpack.c.b16 %v1517, %v1516
        %v1532 = vpack.c.b16 %v1519, %v1518
        %v1533 = vpack.c.b16 %v1521, %v1520
        %v1534 = vpack.c.b16 %v1523, %v1522
        %v1535 = vpack.c.b16 %v1525, %v1524
        %v1536 = vpack.c.b16 %v1527, %v1526
        %v1537 = vpack.c.b16 %v1529, %v1528
        %1546 = vmatpush.bf16.msra.mxu0 %v1537
        %1547 = vmatpush.bf16.msra.mxu0 %v1536
        %1548 = vmatpush.bf16.msra.mxu0 %v1535
        %1549 = vmatpush.bf16.msra.mxu0 %v1534
        %1550 = vmatpush.bf16.msra.mxu0 %v1533
        %1551 = vmatpush.bf16.msra.mxu0 %v1532
        %1552 = vmatpush.bf16.msra.mxu0 %v1531
        %1553 = vmatpush.bf16.msra.mxu0 %v1530
        %1554 = vmatmul.bf16.gmra.mxu0 %v1472
        %v1555 = vpop.f32.mrf.mxu0
        %v1556 = vadd.f32 %v1497, %v1555
        %v1557 = vpop.f32.mrf.mxu0
        %v1558 = vadd.f32 %v1497, %v1557
        %1559 = vmatmul.bf16.gmra.mxu0 %v1473
        %v1560 = vpop.f32.mrf.mxu0
        %v1561 = vadd.f32 %v1497, %v1560
        %v1562 = vpop.f32.mrf.mxu0
        %v1563 = vadd.f32 %v1497, %v1562
        %1564 = vmatmul.bf16.gmra.mxu0 %v1474
        %v1565 = vpop.f32.mrf.mxu0
        %v1566 = vadd.f32 %v1497, %v1565
        %v1567 = vpop.f32.mrf.mxu0
        %v1568 = vadd.f32 %v1497, %v1567
        %1569 = vmatmul.bf16.gmra.mxu0 %v1475
        %v1570 = vpop.f32.mrf.mxu0
        %v1571 = vadd.f32 %v1497, %v1570
        %v1572 = vpop.f32.mrf.mxu0
        %v1573 = vadd.f32 %v1497, %v1572
        %1574 = vmatmul.bf16.gmra.mxu0 %v1476
        %v1575 = vpop.f32.mrf.mxu0
        %v1576 = vadd.f32 %v1497, %v1575
        %v1577 = vpop.f32.mrf.mxu0
        %v1578 = vadd.f32 %v1497, %v1577
        %1579 = vmatmul.bf16.gmra.mxu0 %v1477
        %v1580 = vpop.f32.mrf.mxu0
        %v1581 = vadd.f32 %v1497, %v1580
        %v1582 = vpop.f32.mrf.mxu0
        %v1583 = vadd.f32 %v1497, %v1582
        %1584 = vmatmul.bf16.gmra.mxu0 %v1478
        %v1585 = vpop.f32.mrf.mxu0
        %v1586 = vadd.f32 %v1497, %v1585
        %v1587 = vpop.f32.mrf.mxu0
        %1588 = vdwg.mxu0
        %v1589 = vpack.c.bf16 %v1558, %v1556
        %v1590 = vpack.c.bf16 %v1563, %v1561
        %v1591 = vpack.c.bf16 %v1568, %v1566
        %v1592 = vpack.c.bf16 %v1573, %v1571
        %v1593 = vpack.c.bf16 %v1578, %v1576
        %v1594 = vpack.c.bf16 %v1583, %v1581
        %v1595 = vpack.c.bf16 %v1586, %v1586
        %v1596 = vunpack.c.l.bf16 %v1589
        %v1597 = vunpack.c.h.bf16 %v1589
        %v1598 = vunpack.c.l.bf16 %v1590
        %v1599 = vunpack.c.h.bf16 %v1590
        %v1600 = vunpack.c.l.bf16 %v1591
        %v1601 = vunpack.c.h.bf16 %v1591
        %v1602 = vunpack.c.l.bf16 %v1592
        %v1603 = vunpack.c.h.bf16 %v1592
        %v1604 = vunpack.c.l.bf16 %v1593
        %v1605 = vunpack.c.h.bf16 %v1593
        %v1606 = vunpack.c.l.bf16 %v1594
        %v1607 = vunpack.c.h.bf16 %v1594
        %v1608 = vunpack.c.l.bf16 %v1595
        %v1609 = vtanh.pop %v1596
        %v1610 = vtanh.pop %v1597
        %v1611 = vtanh.pop %v1598
        %v1612 = vtanh.pop %v1599
        %v1613 = vtanh.pop %v1600
        %v1614 = vtanh.pop %v1601
        %v1615 = vtanh.pop %v1602
        %v1616 = vtanh.pop %v1603
        %v1617 = vtanh.pop %v1604
        %v1618 = vtanh.pop %v1605
        %v1619 = vtanh.pop %v1606
        %v1620 = vtanh.pop %v1607
        %v1621 = vtanh.pop %v1608
        %v1622 = vpack.c.bf16 %v1610, %v1609
        %v1623 = vpack.c.bf16 %v1612, %v1611
        %v1624 = vpack.c.bf16 %v1614, %v1613
        %v1625 = vpack.c.bf16 %v1616, %v1615
        %v1626 = vpack.c.bf16 %v1618, %v1617
        %v1627 = vpack.c.bf16 %v1620, %v1619
        %v1628 = vpack.c.bf16 %v1621, %v1621
        %s1629 = scalar_lea.vmem [#allocation6], 192
        %v1630 = vld [vmem:[%s1629] sm:$0xf]
        %v1631 = vld [vmem:[%s1629 + $0x4] sm:$0xf]
        %v1632 = vld [vmem:[%s1629 + $0x8] sm:$0xf]
        %v1633 = vld [vmem:[%s1629 + $0xc] sm:$0xf]
        %v1634 = vld [vmem:[%s1629 + $0x10] sm:$0xf]
        %v1635 = vld [vmem:[%s1629 + $0x14] sm:$0xf]
        %v1636 = vld [vmem:[%s1629 + $0x18] sm:$0xf]
        %v1637 = vld [vmem:[%s1629 + $0x1c] sm:$0xf]
        %v1638 = vld [vmem:[%s1629 + $0x20] sm:$0xf]
        %v1639 = vld [vmem:[%s1629 + $0x24] sm:$0xf]
        %v1640 = vld [vmem:[%s1629 + $0x28] sm:$0xf]
        %v1641 = vld [vmem:[%s1629 + $0x2c] sm:$0xf]
        %v1642 = vld [vmem:[%s1629 + $0x30] sm:$0xf]
        %v1643 = vld [vmem:[%s1629 + $0x34] sm:$0xf]
        %v1644 = vld [vmem:[%s1629 + $0x38] sm:$0xf]
        %v1645 = vld [vmem:[%s1629 + $0x3c] sm:$0xf]
        %v1646 = vld [vmem:[#allocation7 + $0x4] sm:$0x1]
        %v1647 = vperm.slane %v1646, 0
        %v1664 = vunpack.c.l.b16 %v1630
        %v1665 = vunpack.c.l.b16 %v1631
        %v1666 = vunpack.c.l.b16 %v1632
        %v1667 = vunpack.c.l.b16 %v1633
        %v1668 = vunpack.c.l.b16 %v1634
        %v1669 = vunpack.c.l.b16 %v1635
        %v1670 = vunpack.c.l.b16 %v1636
        %v1671 = vunpack.c.l.b16 %v1637
        %v1672 = vunpack.c.l.b16 %v1638
        %v1673 = vunpack.c.l.b16 %v1639
        %v1674 = vunpack.c.l.b16 %v1640
        %v1675 = vunpack.c.l.b16 %v1641
        %v1676 = vunpack.c.l.b16 %v1642
        %v1677 = vunpack.c.l.b16 %v1643
        %v1678 = vunpack.c.l.b16 %v1644
        %v1679 = vunpack.c.l.b16 %v1645
        %v1680 = vpack.c.b16 %v1665, %v1664
        %v1681 = vpack.c.b16 %v1667, %v1666
        %v1682 = vpack.c.b16 %v1669, %v1668
        %v1683 = vpack.c.b16 %v1671, %v1670
        %v1684 = vpack.c.b16 %v1673, %v1672
        %v1685 = vpack.c.b16 %v1675, %v1674
        %v1686 = vpack.c.b16 %v1677, %v1676
        %v1687 = vpack.c.b16 %v1679, %v1678
        %1696 = vmatpush.bf16.msra.mxu0 %v1687
        %1697 = vmatpush.bf16.msra.mxu0 %v1686
        %1698 = vmatpush.bf16.msra.mxu0 %v1685
        %1699 = vmatpush.bf16.msra.mxu0 %v1684
        %1700 = vmatpush.bf16.msra.mxu0 %v1683
        %1701 = vmatpush.bf16.msra.mxu0 %v1682
        %1702 = vmatpush.bf16.msra.mxu0 %v1681
        %1703 = vmatpush.bf16.msra.mxu0 %v1680
        %1704 = vmatmul.bf16.gmra.mxu0 %v1622
        %v1705 = vpop.f32.mrf.mxu0
        %v1706 = vadd.f32 %v1647, %v1705
        %v1707 = vpop.f32.mrf.mxu0
        %v1708 = vadd.f32 %v1647, %v1707
        %1709 = vmatmul.bf16.gmra.mxu0 %v1623
        %v1710 = vpop.f32.mrf.mxu0
        %v1711 = vadd.f32 %v1647, %v1710
        %v1712 = vpop.f32.mrf.mxu0
        %v1713 = vadd.f32 %v1647, %v1712
        %1714 = vmatmul.bf16.gmra.mxu0 %v1624
        %v1715 = vpop.f32.mrf.mxu0
        %v1716 = vadd.f32 %v1647, %v1715
        %v1717 = vpop.f32.mrf.mxu0
        %v1718 = vadd.f32 %v1647, %v1717
        %1719 = vmatmul.bf16.gmra.mxu0 %v1625
        %v1720 = vpop.f32.mrf.mxu0
        %v1721 = vadd.f32 %v1647, %v1720
        %v1722 = vpop.f32.mrf.mxu0
        %v1723 = vadd.f32 %v1647, %v1722
        %1724 = vmatmul.bf16.gmra.mxu0 %v1626
        %v1725 = vpop.f32.mrf.mxu0
        %v1726 = vadd.f32 %v1647, %v1725
        %v1727 = vpop.f32.mrf.mxu0
        %v1728 = vadd.f32 %v1647, %v1727
        %1729 = vmatmul.bf16.gmra.mxu0 %v1627
        %v1730 = vpop.f32.mrf.mxu0
        %v1731 = vadd.f32 %v1647, %v1730
        %v1732 = vpop.f32.mrf.mxu0
        %v1733 = vadd.f32 %v1647, %v1732
        %1734 = vmatmul.bf16.gmra.mxu0 %v1628
        %v1735 = vpop.f32.mrf.mxu0
        %v1736 = vadd.f32 %v1647, %v1735
        %v1737 = vpop.f32.mrf.mxu0
        %1738 = vdwg.mxu0
        %v1739 = vpack.c.bf16 %v1708, %v1706
        %v1740 = vpack.c.bf16 %v1713, %v1711
        %v1741 = vpack.c.bf16 %v1718, %v1716
        %v1742 = vpack.c.bf16 %v1723, %v1721
        %v1743 = vpack.c.bf16 %v1728, %v1726
        %v1744 = vpack.c.bf16 %v1733, %v1731
        %v1745 = vpack.c.bf16 %v1736, %v1736
        %v1746 = vunpack.c.l.bf16 %v1739
        %v1747 = vunpack.c.h.bf16 %v1739
        %v1748 = vunpack.c.l.bf16 %v1740
        %v1749 = vunpack.c.h.bf16 %v1740
        %v1750 = vunpack.c.l.bf16 %v1741
        %v1751 = vunpack.c.h.bf16 %v1741
        %v1752 = vunpack.c.l.bf16 %v1742
        %v1753 = vunpack.c.h.bf16 %v1742
        %v1754 = vunpack.c.l.bf16 %v1743
        %v1755 = vunpack.c.h.bf16 %v1743
        %v1756 = vunpack.c.l.bf16 %v1744
        %v1757 = vunpack.c.h.bf16 %v1744
        %v1758 = vunpack.c.l.bf16 %v1745
        %v1759 = vtanh.pop %v1746
        %v1760 = vtanh.pop %v1747
        %v1761 = vtanh.pop %v1748
        %v1762 = vtanh.pop %v1749
        %v1763 = vtanh.pop %v1750
        %v1764 = vtanh.pop %v1751
        %v1765 = vtanh.pop %v1752
        %v1766 = vtanh.pop %v1753
        %v1767 = vtanh.pop %v1754
        %v1768 = vtanh.pop %v1755
        %v1769 = vtanh.pop %v1756
        %v1770 = vtanh.pop %v1757
        %v1771 = vtanh.pop %v1758
        %v1772 = vpack.c.bf16 %v1760, %v1759
        %v1773 = vpack.c.bf16 %v1762, %v1761
        %v1774 = vpack.c.bf16 %v1764, %v1763
        %v1775 = vpack.c.bf16 %v1766, %v1765
        %v1776 = vpack.c.bf16 %v1768, %v1767
        %v1777 = vpack.c.bf16 %v1770, %v1769
        %v1778 = vpack.c.bf16 %v1771, %v1771
        %s1779 = scalar_lea.vmem [#allocation6], 256
        %v1780 = vld [vmem:[%s1779] sm:$0xf]
        %v1781 = vld [vmem:[%s1779 + $0x4] sm:$0xf]
        %v1782 = vld [vmem:[%s1779 + $0x8] sm:$0xf]
        %v1783 = vld [vmem:[%s1779 + $0xc] sm:$0xf]
        %v1784 = vld [vmem:[%s1779 + $0x10] sm:$0xf]
        %v1785 = vld [vmem:[%s1779 + $0x14] sm:$0xf]
        %v1786 = vld [vmem:[%s1779 + $0x18] sm:$0xf]
        %v1787 = vld [vmem:[%s1779 + $0x1c] sm:$0xf]
        %v1788 = vld [vmem:[%s1779 + $0x20] sm:$0xf]
        %v1789 = vld [vmem:[%s1779 + $0x24] sm:$0xf]
        %v1790 = vld [vmem:[%s1779 + $0x28] sm:$0xf]
        %v1791 = vld [vmem:[%s1779 + $0x2c] sm:$0xf]
        %v1792 = vld [vmem:[%s1779 + $0x30] sm:$0xf]
        %v1793 = vld [vmem:[%s1779 + $0x34] sm:$0xf]
        %v1794 = vld [vmem:[%s1779 + $0x38] sm:$0xf]
        %v1795 = vld [vmem:[%s1779 + $0x3c] sm:$0xf]
        %v1796 = vld [vmem:[#allocation7 + $0x5] sm:$0x1]
        %v1797 = vperm.slane %v1796, 0
        %v1814 = vunpack.c.l.b16 %v1780
        %v1815 = vunpack.c.l.b16 %v1781
        %v1816 = vunpack.c.l.b16 %v1782
        %v1817 = vunpack.c.l.b16 %v1783
        %v1818 = vunpack.c.l.b16 %v1784
        %v1819 = vunpack.c.l.b16 %v1785
        %v1820 = vunpack.c.l.b16 %v1786
        %v1821 = vunpack.c.l.b16 %v1787
        %v1822 = vunpack.c.l.b16 %v1788
        %v1823 = vunpack.c.l.b16 %v1789
        %v1824 = vunpack.c.l.b16 %v1790
        %v1825 = vunpack.c.l.b16 %v1791
        %v1826 = vunpack.c.l.b16 %v1792
        %v1827 = vunpack.c.l.b16 %v1793
        %v1828 = vunpack.c.l.b16 %v1794
        %v1829 = vunpack.c.l.b16 %v1795
        %v1830 = vpack.c.b16 %v1815, %v1814
        %v1831 = vpack.c.b16 %v1817, %v1816
        %v1832 = vpack.c.b16 %v1819, %v1818
        %v1833 = vpack.c.b16 %v1821, %v1820
        %v1834 = vpack.c.b16 %v1823, %v1822
        %v1835 = vpack.c.b16 %v1825, %v1824
        %v1836 = vpack.c.b16 %v1827, %v1826
        %v1837 = vpack.c.b16 %v1829, %v1828
        %1846 = vmatpush.bf16.msra.mxu0 %v1837
        %1847 = vmatpush.bf16.msra.mxu0 %v1836
        %1848 = vmatpush.bf16.msra.mxu0 %v1835
        %1849 = vmatpush.bf16.msra.mxu0 %v1834
        %1850 = vmatpush.bf16.msra.mxu0 %v1833
        %1851 = vmatpush.bf16.msra.mxu0 %v1832
        %1852 = vmatpush.bf16.msra.mxu0 %v1831
        %1853 = vmatpush.bf16.msra.mxu0 %v1830
        %1854 = vmatmul.bf16.gmra.mxu0 %v1772
        %v1855 = vpop.f32.mrf.mxu0
        %v1856 = vadd.f32 %v1797, %v1855
        %v1857 = vpop.f32.mrf.mxu0
        %v1858 = vadd.f32 %v1797, %v1857
        %1859 = vmatmul.bf16.gmra.mxu0 %v1773
        %v1860 = vpop.f32.mrf.mxu0
        %v1861 = vadd.f32 %v1797, %v1860
        %v1862 = vpop.f32.mrf.mxu0
        %v1863 = vadd.f32 %v1797, %v1862
        %1864 = vmatmul.bf16.gmra.mxu0 %v1774
        %v1865 = vpop.f32.mrf.mxu0
        %v1866 = vadd.f32 %v1797, %v1865
        %v1867 = vpop.f32.mrf.mxu0
        %v1868 = vadd.f32 %v1797, %v1867
        %1869 = vmatmul.bf16.gmra.mxu0 %v1775
        %v1870 = vpop.f32.mrf.mxu0
        %v1871 = vadd.f32 %v1797, %v1870
        %v1872 = vpop.f32.mrf.mxu0
        %v1873 = vadd.f32 %v1797, %v1872
        %1874 = vmatmul.bf16.gmra.mxu0 %v1776
        %v1875 = vpop.f32.mrf.mxu0
        %v1876 = vadd.f32 %v1797, %v1875
        %v1877 = vpop.f32.mrf.mxu0
        %v1878 = vadd.f32 %v1797, %v1877
        %1879 = vmatmul.bf16.gmra.mxu0 %v1777
        %v1880 = vpop.f32.mrf.mxu0
        %v1881 = vadd.f32 %v1797, %v1880
        %v1882 = vpop.f32.mrf.mxu0
        %v1883 = vadd.f32 %v1797, %v1882
        %1884 = vmatmul.bf16.gmra.mxu0 %v1778
        %v1885 = vpop.f32.mrf.mxu0
        %v1886 = vadd.f32 %v1797, %v1885
        %v1887 = vpop.f32.mrf.mxu0
        %1888 = vdwg.mxu0
        %vm1889 = vcmask 80896
        %1890 = vst.msk [vmem:[%s270] sm:$0xff] %vm1889, %v1856
        %1891 = vst.msk [vmem:[%s270 + $0x8] sm:$0xff] %vm1889, %v1858
        %1892 = vst.msk [vmem:[%s270 + $0x10] sm:$0xff] %vm1889, %v1861
        %1893 = vst.msk [vmem:[%s270 + $0x18] sm:$0xff] %vm1889, %v1863
        %1894 = vst.msk [vmem:[%s270 + $0x20] sm:$0xff] %vm1889, %v1866
        %1895 = vst.msk [vmem:[%s270 + $0x28] sm:$0xff] %vm1889, %v1868
        %1896 = vst.msk [vmem:[%s270 + $0x30] sm:$0xff] %vm1889, %v1871
        %1897 = vst.msk [vmem:[%s270 + $0x38] sm:$0xff] %vm1889, %v1873
        %1898 = vst.msk [vmem:[%s270 + $0x40] sm:$0xff] %vm1889, %v1876
        %1899 = vst.msk [vmem:[%s270 + $0x48] sm:$0xff] %vm1889, %v1878
        %1900 = vst.msk [vmem:[%s270 + $0x50] sm:$0xff] %vm1889, %v1881
        %1901 = vst.msk [vmem:[%s270 + $0x58] sm:$0xff] %vm1889, %v1883
        %1902 = vst.msk [vmem:[%s270 + $0x60] sm:$0xff] %vm1889, %v1886
        %s1903 = sand.u32 %s117, 1
        %s1904 = sand.u32 %s117, 1
        %s1905 = smul.addr %s1904, 104
        %s1906 = scalar_lea.vmem [#allocation9], %s1905
        // Predicated region
        $region53: #{tpu_custom_call.1} parent=35 // pred_check
          %p1907 = pneg %p127
        $region54: #{tpu_custom_call.1} parent=35 // pred_check_branch
          %1909 = sbr.rel (%p1907) target = $region56
        $region55: #{tpu_custom_call.1} parent=35 // pred_region
          %s1910 = smul.u32 13, %s20
          %s1911 = ssub.s32 25, %s1910
          %p1912 = scmp.lt.s32.totalorder %s1911, 13
          %s1913 = scalar_select %p1912, %s1911, 13
          %s1914 = smul.u32 8, %s1913
          %p1915 = scmp.ne.s32.totalorder 0, %s1914
          %s1916 = smul.addr %s1910, 8
          %s1917 = scalar_lea.vmem %s4, %s1916
          // Predicated region
          $region57: #{tpu_custom_call.1} parent=55 // pred_check
            %p1918 = pneg %p1915
          $region58: #{tpu_custom_call.1} parent=55 // pred_check_branch
            %1920 = sbr.rel (%p1918) target = $region60
          $region59: #{tpu_custom_call.1} parent=55 // pred_region
            // Predicated region
            $region61: #{tpu_custom_call.1} parent=59 // pred_check
              _
            $region62: #{tpu_custom_call.1} parent=59 // pred_check_branch
              %1922 = sbr.rel (0) target = $region64
            $region63: #{tpu_custom_call.1} parent=59 // pred_region
              // Predicated region
              $region83: #{tpu_custom_call.1} parent=63 // pred_check
                _
              $region84: #{tpu_custom_call.1} parent=63 // pred_check_branch
                %1997 = sbr.rel (0) target = $region86
              $region85: #{tpu_custom_call.1} parent=63 // pred_region
                %s1998 = sdiv.u32.pop %s1913, 13
                %s1999 = srem.u32.pop %s1913, 13
                // While loop
                $region87: #{tpu_custom_call.1} parent=85 // loop_pre_header
                  _
                $region88: #{tpu_custom_call.1} parent=85 // loop_header
                  %s2001 = sphi 0, %s2003
                  %p2002 = scmp.ge.s32.totalorder %s2001, %s1998
                  %s2006 = sphi 0, %s2037
                  %s2007 = sphi %s1906, %s2040
                  %s2008 = sphi %s1917, %s2041
                $region89: #{tpu_custom_call.1} parent=85 // loop_header_branch
                  %2005 = sbr.rel (%p2002) target = $region93
                $region90: #{tpu_custom_call.1} parent=85 // loop_body
                  %v2009 = vld [vmem:[%s2007] sm:$0xff]
                  %2010 = vst [vmem:[%s2008] sm:$0xff] %v2009
                  %v2011 = vld [vmem:[%s2007 + $0x8] sm:$0xff]
                  %2012 = vst [vmem:[%s2008 + $0x8] sm:$0xff] %v2011
                  %v2013 = vld [vmem:[%s2007 + $0x10] sm:$0xff]
                  %2014 = vst [vmem:[%s2008 + $0x10] sm:$0xff] %v2013
                  %v2015 = vld [vmem:[%s2007 + $0x18] sm:$0xff]
                  %2016 = vst [vmem:[%s2008 + $0x18] sm:$0xff] %v2015
                  %v2017 = vld [vmem:[%s2007 + $0x20] sm:$0xff]
                  %2018 = vst [vmem:[%s2008 + $0x20] sm:$0xff] %v2017
                  %v2019 = vld [vmem:[%s2007 + $0x28] sm:$0xff]
                  %2020 = vst [vmem:[%s2008 + $0x28] sm:$0xff] %v2019
                  %v2021 = vld [vmem:[%s2007 + $0x30] sm:$0xff]
                  %2022 = vst [vmem:[%s2008 + $0x30] sm:$0xff] %v2021
                  %v2023 = vld [vmem:[%s2007 + $0x38] sm:$0xff]
                  %2024 = vst [vmem:[%s2008 + $0x38] sm:$0xff] %v2023
                  %v2025 = vld [vmem:[%s2007 + $0x40] sm:$0xff]
                  %2026 = vst [vmem:[%s2008 + $0x40] sm:$0xff] %v2025
                  %v2027 = vld [vmem:[%s2007 + $0x48] sm:$0xff]
                  %2028 = vst [vmem:[%s2008 + $0x48] sm:$0xff] %v2027
                  %v2029 = vld [vmem:[%s2007 + $0x50] sm:$0xff]
                  %2030 = vst [vmem:[%s2008 + $0x50] sm:$0xff] %v2029
                  %v2031 = vld [vmem:[%s2007 + $0x58] sm:$0xff]
                  %2032 = vst [vmem:[%s2008 + $0x58] sm:$0xff] %v2031
                  %v2033 = vld [vmem:[%s2007 + $0x60] sm:$0xff]
                  %2034 = vst [vmem:[%s2008 + $0x60] sm:$0xff] %v2033
                  %s2035 = sadd.s32 1, %s2006
                  %p2036 = scmp.ge.s32.totalorder %s2035, %s1998
                  %s2037 = scalar_select %p2036, 0, %s2035
                  %s2038 = smul.u32 %s2037, 104
                  %s2039 = smul.u32 %s2037, 104
                  %s2040 = scalar_lea.vmem %s1906, %s2038 [#allocation9]
                  %s2041 = scalar_lea.vmem %s1917, %s2039
                $region91: #{tpu_custom_call.1} parent=85 // loop_footer
                  %s2003 = sadd.s32 %s2001, 1
                $region92: #{tpu_custom_call.1} parent=85 // loop_footer_branch
                  %2000 = sbr.rel target = $region88
                $region93: #{tpu_custom_call.1} parent=85 // loop_exit
                  _
                %s2042 = sdiv.u32.pop %s1913, 13
                %s2043 = srem.u32.pop %s1913, 13
                %s2044 = smul.u32 %s2042, 13
                %s2045 = smul.u32 8, %s2044
                %s2046 = scalar_lea.vmem %s1906, %s2045 [#allocation9]
                %s2047 = smul.u32 8, %s2044
                %s2048 = scalar_lea.vmem %s1917, %s2047
                // While loop
                $region94: #{tpu_custom_call.1} parent=85 // loop_pre_header
                  _
                $region95: #{tpu_custom_call.1} parent=85 // loop_header
                  %s2050 = sphi 0, %s2052
                  %p2051 = scmp.ge.s32.totalorder %s2050, %s2043
                  %s2055 = sphi 0, %s2062
                  %s2056 = sphi %s2046, %s2065
                  %s2057 = sphi %s2048, %s2066
                $region96: #{tpu_custom_call.1} parent=85 // loop_header_branch
                  %2054 = sbr.rel (%p2051) target = $region100
                $region97: #{tpu_custom_call.1} parent=85 // loop_body
                  %v2058 = vld [vmem:[%s2056] sm:$0xff]
                  %2059 = vst [vmem:[%s2057] sm:$0xff] %v2058
                  %s2060 = sadd.s32 1, %s2055
                  %p2061 = scmp.ge.s32.totalorder %s2060, %s2043
                  %s2062 = scalar_select %p2061, 0, %s2060
                  %s2063 = smul.u32 %s2062, 8
                  %s2064 = smul.u32 %s2062, 8
                  %s2065 = scalar_lea.vmem %s2046, %s2063 [#allocation9]
                  %s2066 = scalar_lea.vmem %s2048, %s2064
                $region98: #{tpu_custom_call.1} parent=85 // loop_footer
                  %s2052 = sadd.s32 %s2050, 1
                $region99: #{tpu_custom_call.1} parent=85 // loop_footer_branch
                  %2049 = sbr.rel target = $region95
                $region100: #{tpu_custom_call.1} parent=85 // loop_exit
                  _
              $region86: #{tpu_custom_call.1} parent=63 // pred_fallthru
                _
              // Predicated region
              $region101: #{tpu_custom_call.1} parent=63 // pred_check
                _
              $region102: #{tpu_custom_call.1} parent=63 // pred_check_branch
                %2068 = sbr.rel target = $region104
              $region103: #{tpu_custom_call.1} parent=63 // pred_region
                _
              $region104: #{tpu_custom_call.1} parent=63 // pred_fallthru
                _
            $region64: #{tpu_custom_call.1} parent=59 // pred_fallthru
              _
            // Predicated region
            $region65: #{tpu_custom_call.1} parent=59 // pred_check
              _
            $region66: #{tpu_custom_call.1} parent=59 // pred_check_branch
              %1924 = sbr.rel target = $region68
            $region67: #{tpu_custom_call.1} parent=59 // pred_region
              %s1926 = ssub.s32 256, 1
              %s1927 = sdiv.u32.pop %s1913, 13
              %s1928 = srem.u32.pop %s1913, 13
              // While loop
              $region69: #{tpu_custom_call.1} parent=67 // loop_pre_header
                _
              $region70: #{tpu_custom_call.1} parent=67 // loop_header
                %s1930 = sphi 0, %s1932
                %p1931 = scmp.ge.s32.totalorder %s1930, %s1927
                %s1935 = sphi 0, %s1966
                %s1936 = sphi %s1906, %s1969
                %s1937 = sphi %s1917, %s1970
              $region71: #{tpu_custom_call.1} parent=67 // loop_header_branch
                %1934 = sbr.rel (%p1931) target = $region75
              $region72: #{tpu_custom_call.1} parent=67 // loop_body
                %v1938 = vld [vmem:[%s1936] sm:%s1926]
                %1939 = vst [vmem:[%s1937] sm:%s1926] %v1938
                %v1940 = vld [vmem:[%s1936 + $0x8] sm:%s1926]
                %1941 = vst [vmem:[%s1937 + $0x8] sm:%s1926] %v1940
                %v1942 = vld [vmem:[%s1936 + $0x10] sm:%s1926]
                %1943 = vst [vmem:[%s1937 + $0x10] sm:%s1926] %v1942
                %v1944 = vld [vmem:[%s1936 + $0x18] sm:%s1926]
                %1945 = vst [vmem:[%s1937 + $0x18] sm:%s1926] %v1944
                %v1946 = vld [vmem:[%s1936 + $0x20] sm:%s1926]
                %1947 = vst [vmem:[%s1937 + $0x20] sm:%s1926] %v1946
                %v1948 = vld [vmem:[%s1936 + $0x28] sm:%s1926]
                %1949 = vst [vmem:[%s1937 + $0x28] sm:%s1926] %v1948
                %v1950 = vld [vmem:[%s1936 + $0x30] sm:%s1926]
                %1951 = vst [vmem:[%s1937 + $0x30] sm:%s1926] %v1950
                %v1952 = vld [vmem:[%s1936 + $0x38] sm:%s1926]
                %1953 = vst [vmem:[%s1937 + $0x38] sm:%s1926] %v1952
                %v1954 = vld [vmem:[%s1936 + $0x40] sm:%s1926]
                %1955 = vst [vmem:[%s1937 + $0x40] sm:%s1926] %v1954
                %v1956 = vld [vmem:[%s1936 + $0x48] sm:%s1926]
                %1957 = vst [vmem:[%s1937 + $0x48] sm:%s1926] %v1956
                %v1958 = vld [vmem:[%s1936 + $0x50] sm:%s1926]
                %1959 = vst [vmem:[%s1937 + $0x50] sm:%s1926] %v1958
                %v1960 = vld [vmem:[%s1936 + $0x58] sm:%s1926]
                %1961 = vst [vmem:[%s1937 + $0x58] sm:%s1926] %v1960
                %v1962 = vld [vmem:[%s1936 + $0x60] sm:%s1926]
                %1963 = vst [vmem:[%s1937 + $0x60] sm:%s1926] %v1962
                %s1964 = sadd.s32 1, %s1935
                %p1965 = scmp.ge.s32.totalorder %s1964, %s1927
                %s1966 = scalar_select %p1965, 0, %s1964
                %s1967 = smul.u32 %s1966, 104
                %s1968 = smul.u32 %s1966, 104
                %s1969 = scalar_lea.vmem %s1906, %s1967 [#allocation9]
                %s1970 = scalar_lea.vmem %s1917, %s1968
              $region73: #{tpu_custom_call.1} parent=67 // loop_footer
                %s1932 = sadd.s32 %s1930, 1
              $region74: #{tpu_custom_call.1} parent=67 // loop_footer_branch
                %1929 = sbr.rel target = $region70
              $region75: #{tpu_custom_call.1} parent=67 // loop_exit
                _
              %s1971 = sdiv.u32.pop %s1913, 13
              %s1972 = srem.u32.pop %s1913, 13
              %s1973 = smul.u32 %s1971, 13
              %s1974 = smul.u32 8, %s1973
              %s1975 = scalar_lea.vmem %s1906, %s1974 [#allocation9]
              %s1976 = smul.u32 8, %s1973
              %s1977 = scalar_lea.vmem %s1917, %s1976
              // While loop
              $region76: #{tpu_custom_call.1} parent=67 // loop_pre_header
                _
              $region77: #{tpu_custom_call.1} parent=67 // loop_header
                %s1979 = sphi 0, %s1981
                %p1980 = scmp.ge.s32.totalorder %s1979, %s1972
                %s1984 = sphi 0, %s1991
                %s1985 = sphi %s1975, %s1994
                %s1986 = sphi %s1977, %s1995
              $region78: #{tpu_custom_call.1} parent=67 // loop_header_branch
                %1983 = sbr.rel (%p1980) target = $region82
              $region79: #{tpu_custom_call.1} parent=67 // loop_body
                %v1987 = vld [vmem:[%s1985] sm:%s1926]
                %1988 = vst [vmem:[%s1986] sm:%s1926] %v1987
                %s1989 = sadd.s32 1, %s1984
                %p1990 = scmp.ge.s32.totalorder %s1989, %s1972
                %s1991 = scalar_select %p1990, 0, %s1989
                %s1992 = smul.u32 %s1991, 8
                %s1993 = smul.u32 %s1991, 8
                %s1994 = scalar_lea.vmem %s1975, %s1992 [#allocation9]
                %s1995 = scalar_lea.vmem %s1977, %s1993
              $region80: #{tpu_custom_call.1} parent=67 // loop_footer
                %s1981 = sadd.s32 %s1979, 1
              $region81: #{tpu_custom_call.1} parent=67 // loop_footer_branch
                %1978 = sbr.rel target = $region77
              $region82: #{tpu_custom_call.1} parent=67 // loop_exit
                _
            $region68: #{tpu_custom_call.1} parent=59 // pred_fallthru
              _
          $region60: #{tpu_custom_call.1} parent=55 // pred_fallthru
            _
          %2069 = vnop
        $region56: #{tpu_custom_call.1} parent=35 // pred_fallthru
          _
      $region36: #{tpu_custom_call.1} parent=5 // pred_fallthru
        _
      %p2070 = scmp.le.s32.totalorder 2, %s15
      // Predicated region
      $region105: #{tpu_custom_call.1} parent=5 // pred_check
        %p2071 = pneg %p2070
      $region106: #{tpu_custom_call.1} parent=5 // pred_check_branch
        %2073 = sbr.rel (%p2071) target = $region108
      $region107: #{tpu_custom_call.1} parent=5 // pred_region
        %s2074 = ssub.s32 %s15, 2
        // Predicated region
        $region109: #{tpu_custom_call.1} parent=107 // pred_check
          %p2075 = pneg %p133
        $region110: #{tpu_custom_call.1} parent=107 // pred_check_branch
          %2077 = sbr.rel (%p2075) target = $region112
        $region111: #{tpu_custom_call.1} parent=107 // pred_region
          %s2078 = sand.u32 %s118, 1
          %s2079 = sand.u32 %s118, 1
          %s2080 = smul.addr %s2079, 104
          %s2081 = scalar_lea.vmem [#allocation9], %s2080
        $region112: #{tpu_custom_call.1} parent=107 // pred_fallthru
          _
      $region108: #{tpu_custom_call.1} parent=5 // pred_fallthru
        _
    $region6: #{tpu_custom_call.1} parent=1 // loop_footer
      %s19 = sadd.s32 1, %s15
    $region7: #{tpu_custom_call.1} parent=1 // loop_footer_branch
      %14 = sbr.rel target = $region3
    $region8: #{tpu_custom_call.1} parent=1 // loop_exit
      _
    %2082 = vsyncpa [#allocation3], 1
    %s2083 = scalar_lea.sflag [#allocation3], 1
    %2084 = vsyncpa %s2083, 1
    %2085 = vsyncpa [#allocation5], 1
    %2086 = vsyncpa [#allocation8], 1

</llo_original>
